<compile_context>
chip_gen: v7x
topology: tpu7x:2x2x1
jax: 0.10.0
libtpu: 0.0.40
codegen_flags: <defaults>
</compile_context>

<pallas_src>
import jax
import jax.numpy as jnp
from jax import lax
from jax.experimental import pallas as pl
from jax.experimental.pallas import tpu as pltpu


# ----------------------------------------------------------------------------
# Hardware / tiling helpers
# ----------------------------------------------------------------------------
def _vmem_capacity_bytes():
    try:
        return int(pltpu.get_tpu_info().vmem_capacity_bytes)
    except Exception:                      # non-TPU / interpret fallback
        return 64 << 20


def _num_tensorcores():
    """2 on v7x-class chips (2 TCs share the parallel grid axes), else 1."""
    try:
        kind = (getattr(jax.devices()[0], "device_kind", "") or "").lower()
        if "v7" in kind:
            return 2
    except Exception:
        pass
    return 1


def _choose_spatial_tile(HW, B, C, heads, p_pad, x_bytes, o_bytes,
                         vmem_cap, num_cores):
    # ~vmem_cap // 8 per pipelined working set: 16 MiB on v5e/v6e, 8 MiB on
    # v7x -> tiles of 512-1024 spatial columns for real BotNet channel counts.
    budget = max(vmem_cap // 8, 2 << 20)
    per_col = 2 * C * x_bytes + 2 * heads * p_pad * o_bytes   # dbl-buffered in/out
    t = min(budget // max(per_col, 1), 1024)
    if t >= HW:
        return HW                          # one full block along HW (always legal)
    if t >= 512:
        t = (t // 256) * 256               # 256-multiples for 256x256 MXU (v6e/v7x)
    else:
        t = max(128, (t // 128) * 128)     # input-block lane axis needs 128-multiples
    if num_cores >= 2:
        # v7x only: keep >= 4 parallel grid steps so each of the 2 cores gets
        # >= 2 pipelined steps and its DMA stays hidden.
        while B * pl.cdiv(HW, t) < 4 and t > 128:
            t = max(128, ((t // 2) // 128) * 128)
    return t


# ----------------------------------------------------------------------------
# Kernel: contract channels straight out of the NCHW block, one dot per head,
# writing directly in the consumer's (heads, HW, p) layout.
# ----------------------------------------------------------------------------
def _gpw_kernel(x_ref, w_ref, o_ref):
    # x_ref: (C, T)          NCHW block (channels on sublanes, spatial on lanes)
    # w_ref: (heads, C, Pp)  small resident weights (compute dtype)
    # o_ref: (heads, T, Pp)  output block
    a = x_ref[...].astype(w_ref.dtype)          # cast per-block in VMEM (no HBM pass)
    for h in range(w_ref.shape[0]):             # heads: small static python int
        r = lax.dot_general(                    # contract C: (C,T)^T @ (C,Pp) -> (T,Pp)
            a, w_ref[h],
            dimension_numbers=(((0,), (0,)), ((), ())),
            preferred_element_type=jnp.float32)  # f32 accumulation on the MXU
        o_ref[h] = r.astype(o_ref.dtype)


def _build_gpw_call(B, C, HW, heads, p_pad, tile, out_dtype,
                    vmem_limit, cost, single_buffer_weight):
    w_kwargs = dict(pipeline_mode=pl.Buffered(1)) if single_buffer_weight else {}
    grid_spec = pltpu.PrefetchScalarGridSpec(
        num_scalar_prefetch=0,
        grid=(B, pl.cdiv(HW, tile)),
        in_specs=[
            # NCHW input read directly: all channels x one spatial tile.
            pl.BlockSpec((None, C, tile), lambda b, s: (b, 0, s)),
            # Tiny weight, constant index_map => fetched once; single-buffered.
            pl.BlockSpec((heads, C, p_pad), lambda b, s: (0, 0, 0), **w_kwargs),
        ],
        # Written straight in (B, heads, HW, p_pad) -- no post-kernel transpose.
        out_specs=pl.BlockSpec((None, heads, tile, p_pad),
                               lambda b, s: (b, 0, s, 0)),
    )
    return pl.pallas_call(
        _gpw_kernel,
        out_shape=jax.ShapeDtypeStruct((B, heads, HW, p_pad), out_dtype),
        grid_spec=grid_spec,
        compiler_params=pltpu.CompilerParams(
            dimension_semantics=("parallel", "parallel"),
            vmem_limit_bytes=vmem_limit),
        cost_estimate=cost,
    )


_SINGLE_BUFFER_WEIGHT_OK = True   # flipped off if pl.Buffered(1) is unsupported


# ----------------------------------------------------------------------------
# GroupPointWise forward
# ----------------------------------------------------------------------------
def group_pointwise_forward(x_nchw, w, *, use_bf16=True, out_dtype=None):
    """einsum('bhwc,cnp->bnhwp') of x.permute(0,2,3,1).float() with w (C, heads, p)."""
    global _SINGLE_BUFFER_WEIGHT_OK

    B, C, H, W = x_nchw.shape
    Cw, heads, p = w.shape
    assert C == Cw, (C, Cw)
    HW = H * W

    if out_dtype is None:
        out_dtype = jnp.float32            # torch returns float(); bf16 halves writeback
    compute_dtype = jnp.bfloat16 if use_bf16 else jnp.float32

    # Lane-density guard: pad the per-head projection axis to a full lane
    # group when narrow (demo p=8).  Real BotNet configs have p == 128.
    p_pad = 128 if p < 128 else p

    # Weights: (C, heads, p) -> (heads, C, p_pad) in compute dtype.  Tiny.
    w_prep = jnp.transpose(w, (1, 0, 2)).astype(compute_dtype)
    if p_pad != p:
        w_prep = jnp.pad(w_prep, ((0, 0), (0, 0), (0, p_pad - p)))

    # Input stays NCHW: no permute, no pre-cast pass (kernel casts in VMEM).
    if not jnp.issubdtype(x_nchw.dtype, jnp.floating):
        x_nchw = x_nchw.astype(jnp.float32)          # mirrors `.float()`
    x3 = x_nchw.reshape(B, C, HW)                    # trailing-dim merge: free

    x_bytes = x3.dtype.itemsize
    o_bytes = jnp.dtype(out_dtype).itemsize
    w_bytes = jnp.dtype(compute_dtype).itemsize

    vmem_cap = _vmem_capacity_bytes()
    tile = _choose_spatial_tile(HW, B, C, heads, p_pad, x_bytes, o_bytes,
                                vmem_cap, _num_tensorcores())

    needed = (2 * tile * C * x_bytes                   # double-buffered input blocks
              + 2 * tile * heads * p_pad * o_bytes     # double-buffered output blocks
              + 2 * heads * C * p_pad * w_bytes)       # weight (worst case 2 buffers)
    vmem_limit = int(min(max(32 << 20, needed + (4 << 20)), vmem_cap // 2))

    cost = pl.CostEstimate(
        flops=2 * B * HW * C * heads * p_pad,
        transcendentals=0,
        bytes_accessed=(B * C * HW * x_bytes
                        + heads * C * p_pad * w_bytes
                        + B * heads * HW * p_pad * o_bytes))

    call = _build_gpw_call(B, C, HW, heads, p_pad, tile, out_dtype,
                           vmem_limit, cost, _SINGLE_BUFFER_WEIGHT_OK)
    try:
        y = call(x3, w_prep)
    except Exception:
        if not _SINGLE_BUFFER_WEIGHT_OK:
            raise
        # This jax build rejected pipeline_mode=pl.Buffered(1): retry with the
        # default double-buffered weight spec (semantics identical).
        _SINGLE_BUFFER_WEIGHT_OK = False
        y = _build_gpw_call(B, C, HW, heads, p_pad, tile, out_dtype,
                            vmem_limit, cost, False)(x3, w_prep)

    if p_pad != p:
        y = y[..., :p]
    return y.reshape(B, heads, H, W, p)               # free reshape, no transpose


class GroupPointWise:
    """Pallas port of model/botnet.py::GroupPointWise (forward only)."""

    def __init__(self, key, in_channels, heads=4, proj_factor=1,
                 target_dimension=None, use_bf16=True, out_dtype=None):
        if target_dimension is not None:
            proj_channels = target_dimension // proj_factor
        else:
            proj_channels = in_channels // proj_factor
        self.heads = heads
        self.use_bf16 = use_bf16
        self.out_dtype = out_dtype
        # nn.init.normal_(self.w, std=0.01)
        self.w = (0.01 * jax.random.normal(
            key, (in_channels, heads, proj_channels // heads))).astype(jnp.float32)

    def __call__(self, x_nchw):
        return group_pointwise_forward(x_nchw, self.w,
                                       use_bf16=self.use_bf16,
                                       out_dtype=self.out_dtype)


# ----------------------------------------------------------------------------
if __name__ == "__main__":
    key = jax.random.PRNGKey(0)
    wkey, xkey = jax.random.split(key)

    B, C, H, W = 2, 32, 16, 16
    heads = 4
    module = GroupPointWise(wkey, in_channels=C, heads=heads, proj_factor=1)
    x = jax.random.normal(xkey, (B, C, H, W), jnp.float32)      # NCHW, like torch

    out = jax.block_until_ready(module(x))
    p = module.w.shape[-1]
    assert out.shape == (B, heads, H, W, p), out.shape
    assert bool(jnp.all(jnp.isfinite(out)))

    # Pure-JAX f32 reference (bf16 operands with f32 MXU accumulation in-kernel).
    ref = jnp.einsum('bhwc,cnp->bnhwp',
                     jnp.transpose(x, (0, 2, 3, 1)).astype(jnp.float32),
                     module.w)
    err = float(jnp.max(jnp.abs(out - ref)))
    assert err < 5e-3, f"max abs err {err}"

    # bf16-output fast path (halved HBM writeback); accumulation stays f32.
    out_bf16 = jax.block_until_ready(
        group_pointwise_forward(x, module.w, use_bf16=True,
                                out_dtype=jnp.bfloat16))
    assert out_bf16.dtype == jnp.bfloat16
    err_bf16 = float(jnp.max(jnp.abs(out_bf16.astype(jnp.float32) - ref)))
    assert err_bf16 < 2e-2, f"max abs err (bf16 out) {err_bf16}"

    print("KERNEL_OK")
</pallas_src>

<mosaic_0001>
module attributes {stable_mosaic.version = 11 : i64} {
  func.func @_gpw_kernel(%arg0: i32, %arg1: i32, %arg2: memref<1x32x256xf32, #tpu.memory_space<vmem>>, %arg3: memref<4x32x128xbf16, #tpu.memory_space<vmem>>, %arg4: memref<1x4x256x128xf32, #tpu.memory_space<vmem>>) attributes {dimension_semantics = [#tpu.dimension_semantics<parallel>, #tpu.dimension_semantics<parallel>], iteration_bounds = array<i64: 2, 1>, scalar_prefetch = 0 : i64, scratch_operands = 0 : i64, tpu.core_type = #tpu.core_type<tc>, window_params = [{transform_indices = @transform_0, window_bounds = array<i64: 1, 32, 256>}, {pipeline_mode = #tpu.pipeline_mode<synchronous>, transform_indices = @transform_1, window_bounds = array<i64: 4, 32, 128>}, {transform_indices = @transform_2, window_bounds = array<i64: 1, 4, 256, 128>}]} {
    %c0 = arith.constant 0 : index
    %c0_0 = arith.constant 0 : index
    %c0_1 = arith.constant 0 : index
    %0 = vector.load %arg2[%c0, %c0_0, %c0_1] : memref<1x32x256xf32, #tpu.memory_space<vmem>>, vector<1x32x256xf32>
    %1 = vector.shape_cast %0 : vector<1x32x256xf32> to vector<32x256xf32>
    %2 = arith.truncf %1 : vector<32x256xf32> to vector<32x256xbf16>
    %c0_2 = arith.constant 0 : index
    %c0_3 = arith.constant 0 : index
    %c0_4 = arith.constant 0 : index
    %3 = vector.load %arg3[%c0_2, %c0_3, %c0_4] : memref<4x32x128xbf16, #tpu.memory_space<vmem>>, vector<1x32x128xbf16>
    %4 = vector.shape_cast %3 : vector<1x32x128xbf16> to vector<32x128xbf16>
    %cst = arith.constant dense<0.000000e+00> : vector<256x128xf32>
    %5 = tpu.matmul %2, %4, %cst {dimension_numbers = #tpu.dot_dimension_numbers<[0], [0], [1], [1], [0, 1, 1, 1], [], []>} : vector<32x256xbf16>, vector<32x128xbf16>, vector<256x128xf32> -> vector<256x128xf32>
    %c0_5 = arith.constant 0 : index
    %c0_6 = arith.constant 0 : index
    %c0_7 = arith.constant 0 : index
    %c0_8 = arith.constant 0 : index
    %6 = vector.load %arg4[%c0_5, %c0_6, %c0_7, %c0_8] : memref<1x4x256x128xf32, #tpu.memory_space<vmem>>, vector<1x1x256x128xf32>
    %7 = vector.shape_cast %6 : vector<1x1x256x128xf32> to vector<256x128xf32>
    %8 = vector.shape_cast %5 : vector<256x128xf32> to vector<1x1x256x128xf32>
    tpu.vector_store %arg4[%c0_5, %c0_6, %c0_7, %c0_8], %8 {strides = array<i32>} : memref<1x4x256x128xf32, #tpu.memory_space<vmem>>, vector<1x1x256x128xf32>,
    %c1 = arith.constant 1 : index
    %c0_9 = arith.constant 0 : index
    %c0_10 = arith.constant 0 : index
    %9 = vector.load %arg3[%c1, %c0_9, %c0_10] : memref<4x32x128xbf16, #tpu.memory_space<vmem>>, vector<1x32x128xbf16>
    %10 = vector.shape_cast %9 : vector<1x32x128xbf16> to vector<32x128xbf16>
    %cst_11 = arith.constant dense<0.000000e+00> : vector<256x128xf32>
    %11 = tpu.matmul %2, %10, %cst_11 {dimension_numbers = #tpu.dot_dimension_numbers<[0], [0], [1], [1], [0, 1, 1, 1], [], []>} : vector<32x256xbf16>, vector<32x128xbf16>, vector<256x128xf32> -> vector<256x128xf32>
    %c0_12 = arith.constant 0 : index
    %c1_13 = arith.constant 1 : index
    %c0_14 = arith.constant 0 : index
    %c0_15 = arith.constant 0 : index
    %12 = vector.load %arg4[%c0_12, %c1_13, %c0_14, %c0_15] : memref<1x4x256x128xf32, #tpu.memory_space<vmem>>, vector<1x1x256x128xf32>
    %13 = vector.shape_cast %12 : vector<1x1x256x128xf32> to vector<256x128xf32>
    %14 = vector.shape_cast %11 : vector<256x128xf32> to vector<1x1x256x128xf32>
    tpu.vector_store %arg4[%c0_12, %c1_13, %c0_14, %c0_15], %14 {strides = array<i32>} : memref<1x4x256x128xf32, #tpu.memory_space<vmem>>, vector<1x1x256x128xf32>,
    %c2 = arith.constant 2 : index
    %c0_16 = arith.constant 0 : index
    %c0_17 = arith.constant 0 : index
    %15 = vector.load %arg3[%c2, %c0_16, %c0_17] : memref<4x32x128xbf16, #tpu.memory_space<vmem>>, vector<1x32x128xbf16>
    %16 = vector.shape_cast %15 : vector<1x32x128xbf16> to vector<32x128xbf16>
    %cst_18 = arith.constant dense<0.000000e+00> : vector<256x128xf32>
    %17 = tpu.matmul %2, %16, %cst_18 {dimension_numbers = #tpu.dot_dimension_numbers<[0], [0], [1], [1], [0, 1, 1, 1], [], []>} : vector<32x256xbf16>, vector<32x128xbf16>, vector<256x128xf32> -> vector<256x128xf32>
    %c0_19 = arith.constant 0 : index
    %c2_20 = arith.constant 2 : index
    %c0_21 = arith.constant 0 : index
    %c0_22 = arith.constant 0 : index
    %18 = vector.load %arg4[%c0_19, %c2_20, %c0_21, %c0_22] : memref<1x4x256x128xf32, #tpu.memory_space<vmem>>, vector<1x1x256x128xf32>
    %19 = vector.shape_cast %18 : vector<1x1x256x128xf32> to vector<256x128xf32>
    %20 = vector.shape_cast %17 : vector<256x128xf32> to vector<1x1x256x128xf32>
    tpu.vector_store %arg4[%c0_19, %c2_20, %c0_21, %c0_22], %20 {strides = array<i32>} : memref<1x4x256x128xf32, #tpu.memory_space<vmem>>, vector<1x1x256x128xf32>,
    %c3 = arith.constant 3 : index
    %c0_23 = arith.constant 0 : index
    %c0_24 = arith.constant 0 : index
    %21 = vector.load %arg3[%c3, %c0_23, %c0_24] : memref<4x32x128xbf16, #tpu.memory_space<vmem>>, vector<1x32x128xbf16>
    %22 = vector.shape_cast %21 : vector<1x32x128xbf16> to vector<32x128xbf16>
    %cst_25 = arith.constant dense<0.000000e+00> : vector<256x128xf32>
    %23 = tpu.matmul %2, %22, %cst_25 {dimension_numbers = #tpu.dot_dimension_numbers<[0], [0], [1], [1], [0, 1, 1, 1], [], []>} : vector<32x256xbf16>, vector<32x128xbf16>, vector<256x128xf32> -> vector<256x128xf32>
    %c0_26 = arith.constant 0 : index
    %c3_27 = arith.constant 3 : index
    %c0_28 = arith.constant 0 : index
    %c0_29 = arith.constant 0 : index
    %24 = vector.load %arg4[%c0_26, %c3_27, %c0_28, %c0_29] : memref<1x4x256x128xf32, #tpu.memory_space<vmem>>, vector<1x1x256x128xf32>
    %25 = vector.shape_cast %24 : vector<1x1x256x128xf32> to vector<256x128xf32>
    %26 = vector.shape_cast %23 : vector<256x128xf32> to vector<1x1x256x128xf32>
    tpu.vector_store %arg4[%c0_26, %c3_27, %c0_28, %c0_29], %26 {strides = array<i32>} : memref<1x4x256x128xf32, #tpu.memory_space<vmem>>, vector<1x1x256x128xf32>,
    return
  }
  func.func @transform_0(%arg0: i32, %arg1: i32) -> (i32, i32, i32) {
    %c0_i32 = arith.constant 0 : i32
    %c0_i32_0 = arith.constant 0 : i32
    return %arg0, %c0_i32, %arg1 : i32, i32, i32
  }
  func.func @transform_1(%arg0: i32, %arg1: i32) -> (i32, i32, i32) {
    %c0_i32 = arith.constant 0 : i32
    %c0_i32_0 = arith.constant 0 : i32
    %c0_i32_1 = arith.constant 0 : i32
    %c0_i32_2 = arith.constant 0 : i32
    return %c0_i32, %c0_i32_0, %c0_i32_1 : i32, i32, i32
  }
  func.func @transform_2(%arg0: i32, %arg1: i32) -> (i32, i32, i32, i32) {
    %c0_i32 = arith.constant 0 : i32
    %c0_i32_0 = arith.constant 0 : i32
    %c0_i32_1 = arith.constant 0 : i32
    return %arg0, %c0_i32, %arg1, %c0_i32_0 : i32, i32, i32, i32
  }
}

module attributes {stable_mosaic.version = 11 : i64} {
  func.func @_gpw_kernel(%arg0: i32, %arg1: i32, %arg2: memref<1x32x256xf32, #tpu.memory_space<vmem>>, %arg3: memref<4x32x128xbf16, #tpu.memory_space<vmem>>, %arg4: memref<1x4x256x128xf32, #tpu.memory_space<vmem>>) attributes {dimension_semantics = [#tpu.dimension_semantics<parallel>, #tpu.dimension_semantics<parallel>], iteration_bounds = array<i64: 2, 1>, scalar_prefetch = 0 : i64, scratch_operands = 0 : i64, tpu.core_type = #tpu.core_type<tc>, window_params = [{transform_indices = @transform_0, window_bounds = array<i64: 1, 32, 256>}, {pipeline_mode = #tpu.pipeline_mode<synchronous>, transform_indices = @transform_1, window_bounds = array<i64: 4, 32, 128>}, {transform_indices = @transform_2, window_bounds = array<i64: 1, 4, 256, 128>}]} {
    %c0 = arith.constant 0 : index
    %c0_0 = arith.constant 0 : index
    %c0_1 = arith.constant 0 : index
    %0 = vector.load %arg2[%c0, %c0_0, %c0_1] : memref<1x32x256xf32, #tpu.memory_space<vmem>>, vector<1x32x256xf32>
    %1 = vector.shape_cast %0 : vector<1x32x256xf32> to vector<32x256xf32>
    %2 = arith.truncf %1 : vector<32x256xf32> to vector<32x256xbf16>
    %c0_2 = arith.constant 0 : index
    %c0_3 = arith.constant 0 : index
    %c0_4 = arith.constant 0 : index
    %3 = vector.load %arg3[%c0_2, %c0_3, %c0_4] : memref<4x32x128xbf16, #tpu.memory_space<vmem>>, vector<1x32x128xbf16>
    %4 = vector.shape_cast %3 : vector<1x32x128xbf16> to vector<32x128xbf16>
    %cst = arith.constant dense<0.000000e+00> : vector<256x128xf32>
    %5 = tpu.matmul %2, %4, %cst {dimension_numbers = #tpu.dot_dimension_numbers<[0], [0], [1], [1], [0, 1, 1, 1], [], []>} : vector<32x256xbf16>, vector<32x128xbf16>, vector<256x128xf32> -> vector<256x128xf32>
    %c0_5 = arith.constant 0 : index
    %c0_6 = arith.constant 0 : index
    %c0_7 = arith.constant 0 : index
    %c0_8 = arith.constant 0 : index
    %6 = vector.load %arg4[%c0_5, %c0_6, %c0_7, %c0_8] : memref<1x4x256x128xf32, #tpu.memory_space<vmem>>, vector<1x1x256x128xf32>
    %7 = vector.shape_cast %6 : vector<1x1x256x128xf32> to vector<256x128xf32>
    %8 = vector.shape_cast %5 : vector<256x128xf32> to vector<1x1x256x128xf32>
    tpu.vector_store %arg4[%c0_5, %c0_6, %c0_7, %c0_8], %8 {strides = array<i32>} : memref<1x4x256x128xf32, #tpu.memory_space<vmem>>, vector<1x1x256x128xf32>,
    %c1 = arith.constant 1 : index
    %c0_9 = arith.constant 0 : index
    %c0_10 = arith.constant 0 : index
    %9 = vector.load %arg3[%c1, %c0_9, %c0_10] : memref<4x32x128xbf16, #tpu.memory_space<vmem>>, vector<1x32x128xbf16>
    %10 = vector.shape_cast %9 : vector<1x32x128xbf16> to vector<32x128xbf16>
    %cst_11 = arith.constant dense<0.000000e+00> : vector<256x128xf32>
    %11 = tpu.matmul %2, %10, %cst_11 {dimension_numbers = #tpu.dot_dimension_numbers<[0], [0], [1], [1], [0, 1, 1, 1], [], []>} : vector<32x256xbf16>, vector<32x128xbf16>, vector<256x128xf32> -> vector<256x128xf32>
    %c0_12 = arith.constant 0 : index
    %c1_13 = arith.constant 1 : index
    %c0_14 = arith.constant 0 : index
    %c0_15 = arith.constant 0 : index
    %12 = vector.load %arg4[%c0_12, %c1_13, %c0_14, %c0_15] : memref<1x4x256x128xf32, #tpu.memory_space<vmem>>, vector<1x1x256x128xf32>
    %13 = vector.shape_cast %12 : vector<1x1x256x128xf32> to vector<256x128xf32>
    %14 = vector.shape_cast %11 : vector<256x128xf32> to vector<1x1x256x128xf32>
    tpu.vector_store %arg4[%c0_12, %c1_13, %c0_14, %c0_15], %14 {strides = array<i32>} : memref<1x4x256x128xf32, #tpu.memory_space<vmem>>, vector<1x1x256x128xf32>,
    %c2 = arith.constant 2 : index
    %c0_16 = arith.constant 0 : index
    %c0_17 = arith.constant 0 : index
    %15 = vector.load %arg3[%c2, %c0_16, %c0_17] : memref<4x32x128xbf16, #tpu.memory_space<vmem>>, vector<1x32x128xbf16>
    %16 = vector.shape_cast %15 : vector<1x32x128xbf16> to vector<32x128xbf16>
    %cst_18 = arith.constant dense<0.000000e+00> : vector<256x128xf32>
    %17 = tpu.matmul %2, %16, %cst_18 {dimension_numbers = #tpu.dot_dimension_numbers<[0], [0], [1], [1], [0, 1, 1, 1], [], []>} : vector<32x256xbf16>, vector<32x128xbf16>, vector<256x128xf32> -> vector<256x128xf32>
    %c0_19 = arith.constant 0 : index
    %c2_20 = arith.constant 2 : index
    %c0_21 = arith.constant 0 : index
    %c0_22 = arith.constant 0 : index
    %18 = vector.load %arg4[%c0_19, %c2_20, %c0_21, %c0_22] : memref<1x4x256x128xf32, #tpu.memory_space<vmem>>, vector<1x1x256x128xf32>
    %19 = vector.shape_cast %18 : vector<1x1x256x128xf32> to vector<256x128xf32>
    %20 = vector.shape_cast %17 : vector<256x128xf32> to vector<1x1x256x128xf32>
    tpu.vector_store %arg4[%c0_19, %c2_20, %c0_21, %c0_22], %20 {strides = array<i32>} : memref<1x4x256x128xf32, #tpu.memory_space<vmem>>, vector<1x1x256x128xf32>,
    %c3 = arith.constant 3 : index
    %c0_23 = arith.constant 0 : index
    %c0_24 = arith.constant 0 : index
    %21 = vector.load %arg3[%c3, %c0_23, %c0_24] : memref<4x32x128xbf16, #tpu.memory_space<vmem>>, vector<1x32x128xbf16>
    %22 = vector.shape_cast %21 : vector<1x32x128xbf16> to vector<32x128xbf16>
    %cst_25 = arith.constant dense<0.000000e+00> : vector<256x128xf32>
    %23 = tpu.matmul %2, %22, %cst_25 {dimension_numbers = #tpu.dot_dimension_numbers<[0], [0], [1], [1], [0, 1, 1, 1], [], []>} : vector<32x256xbf16>, vector<32x128xbf16>, vector<256x128xf32> -> vector<256x128xf32>
    %c0_26 = arith.constant 0 : index
    %c3_27 = arith.constant 3 : index
    %c0_28 = arith.constant 0 : index
    %c0_29 = arith.constant 0 : index
    %24 = vector.load %arg4[%c0_26, %c3_27, %c0_28, %c0_29] : memref<1x4x256x128xf32, #tpu.memory_space<vmem>>, vector<1x1x256x128xf32>
    %25 = vector.shape_cast %24 : vector<1x1x256x128xf32> to vector<256x128xf32>
    %26 = vector.shape_cast %23 : vector<256x128xf32> to vector<1x1x256x128xf32>
    tpu.vector_store %arg4[%c0_26, %c3_27, %c0_28, %c0_29], %26 {strides = array<i32>} : memref<1x4x256x128xf32, #tpu.memory_space<vmem>>, vector<1x1x256x128xf32>,
    return
  }
  func.func @transform_0(%arg0: i32, %arg1: i32) -> (i32, i32, i32) {
    %c0_i32 = arith.constant 0 : i32
    %c0_i32_0 = arith.constant 0 : i32
    return %arg0, %c0_i32, %arg1 : i32, i32, i32
  }
  func.func @transform_1(%arg0: i32, %arg1: i32) -> (i32, i32, i32) {
    %c0_i32 = arith.constant 0 : i32
    %c0_i32_0 = arith.constant 0 : i32
    %c0_i32_1 = arith.constant 0 : i32
    %c0_i32_2 = arith.constant 0 : i32
    return %c0_i32, %c0_i32_0, %c0_i32_1 : i32, i32, i32
  }
  func.func @transform_2(%arg0: i32, %arg1: i32) -> (i32, i32, i32, i32) {
    %c0_i32 = arith.constant 0 : i32
    %c0_i32_0 = arith.constant 0 : i32
    %c0_i32_1 = arith.constant 0 : i32
    return %arg0, %c0_i32, %arg1, %c0_i32_0 : i32, i32, i32, i32
  }
}

</mosaic_0001>

<llo_original>
// kernel: tpu_custom_call.1
$region0: #{tpu_custom_call.1}
  #allocation0 [shape = 'u32[]', space=smem, size = 0x4, offset = 0x4, fixed_abs, tag = 'smem constant byte address 0x4 - core index']
  #allocation1 [shape = 'u32[144,128]{1,0:T(1,128)}', space=vmem, size = 0x12000, scoped, tag = 'internal scratch']
  %s0 = inlined_call_operand.hbm [shape: f32[2,32,256], index: 0, kind: input, shape index: {}]
  %s1 = inlined_call_operand.hbm [shape: bf16[4,32,128], index: 1, kind: input, shape index: {}]
  %s2 = inlined_call_operand.hbm [shape: f32[2,4,256,128], index: 2, kind: output, shape index: {}]
  %s3 = sld [smem:[#allocation0]]
  $region49: #{tpu_custom_call.1} parent=0
    _
  %s5 = ssub.s32 1, %s3
  %s6 = scalar_select 0, %s5, %s3
  $region1: #{tpu_custom_call.1} parent=0
    #allocation2 [shape = 'u8[65536]{0}', space=vmem, size = 0x10000, scoped, tag = 'input window, operand 0']
    #allocation3 [shape = 's32[2]{0}', space=sflag, size = 0x8, scoped, tag = 'scoped memory for tpu_custom_call.1']
    #allocation4 [shape = 's32[2]{0}', space=sflag, size = 0x8, scoped, tag = 'scoped memory for tpu_custom_call.1']
    #allocation5 [shape = 'u8[32768]{0}', space=vmem, size = 0x8000, scoped, tag = 'input window, operand 1, single buffered']
    #allocation6 [shape = 's32[1]{0}', space=sflag, size = 0x4, scoped, tag = 'scoped memory for tpu_custom_call.1']
    #allocation7 [shape = 'u8[1048576]{0}', space=vmem, size = 0x100000, scoped, tag = 'output window, operand 0']
    %7 = vsyncpa [#allocation3], 0
    %s8 = scalar_lea.sflag [#allocation3], 1
    %9 = vsyncpa %s8, 0
    %10 = vsyncpa [#allocation6], 0
    %11 = vsyncpa [#allocation4], 0
    %s12 = scalar_lea.sflag [#allocation4], 1
    %13 = vsyncpa %s12, 0
    loop: start=0, step=1, limit=4
    $region2: #{tpu_custom_call.1} parent=1 // loop_pre_header
      _
    $region3: #{tpu_custom_call.1} parent=1 // loop_header
      %s15 = sphi 0, %s19
      %p16 = scmp.ge.s32.totalorder %s15, 4
      %s22 = sphi 0, %s34
      %s23 = sphi 0, %s30
      %s24 = sphi 0, %s22
      %s25 = sphi 0, %s23
      %s26 = sphi 0, %s24
      %s27 = sphi 0, %s25
      %s39 = sphi 0, %s41
      %s42 = sphi 0, %s39
      %s43 = sphi 0, %s42
      %s59 = sphi 0, %s43
      %s63 = sphi 0, %s63
      %s65 = sphi 0, %s63
      %s66 = sphi 0, %s65
      %s80 = sphi 0, %s66
      %s88 = sphi 0, %s90
      %s91 = sphi 0, %s88
      %s92 = sphi 0, %s91
      %s108 = sphi 0, %s92
    $region4: #{tpu_custom_call.1} parent=1 // loop_header_branch
      %18 = sbr.rel (%p16) target = $region8
    $region5: #{tpu_custom_call.1} parent=1 // loop_body
      %s20 = ssub.s32 %s15, 1
      %s21 = ssub.s32 %s15, 2
      %s28 = sadd.s32 1, %s23
      %p29 = scmp.ge.s32.totalorder %s28, 1
      %s30 = scalar_select %p29, 0, %s28
      %s31 = sadd.s32 1, %s22
      %s32 = scalar_select %p29, %s31, %s22
      %p33 = scmp.ge.s32.totalorder %s32, 2
      %s34 = scalar_select %p33, 0, %s32
      %s35 = ssub.s32 %s22, %s34
      %s36 = ssub.s32 %s23, %s30
      %s37 = sor.u32 %s35, %s36
      %p38 = scmp.eq.s32.totalorder %s37, 0
      %s40 = sadd.s32 %s39, 1
      %s41 = scalar_select %p38, %s39, %s40
      %p44 = pneg %p38
      %p45 = scmp.eq.s32.totalorder %s15, 1
      %p46 = por %p44, %p45
      %p47 = scmp.ne.s32.totalorder %s39, %s42
      %p48 = scmp.eq.s32.totalorder %s15, 0
      %p49 = por %p47, %p48
      %p50 = scmp.ne.s32.totalorder %s39, %s42
      %p51 = scmp.eq.s32.totalorder %s20, 1
      %p52 = por %p50, %p51
      %p53 = scmp.ne.s32.totalorder %s42, %s43
      %p54 = scmp.eq.s32.totalorder %s20, 0
      %p55 = por %p53, %p54
      %p56 = scmp.ne.s32.totalorder %s42, %s43
      %p57 = scmp.eq.s32.totalorder %s21, 1
      %p58 = por %p56, %p57
      %p60 = scmp.ne.s32.totalorder %s43, %s59
      %p61 = scmp.eq.s32.totalorder %s21, 0
      %p62 = por %p60, %p61
      %s64 = sadd.s32 %s63, 1
      %p67 = scmp.eq.s32.totalorder %s15, 1
      %p68 = scmp.ne.s32.totalorder %s63, %s65
      %p69 = scmp.eq.s32.totalorder %s15, 0
      %p70 = por %p68, %p69
      %p71 = scmp.ne.s32.totalorder %s63, %s65
      %p72 = scmp.eq.s32.totalorder %s20, 1
      %p73 = por %p71, %p72
      %p74 = scmp.ne.s32.totalorder %s65, %s66
      %p75 = scmp.eq.s32.totalorder %s20, 0
      %p76 = por %p74, %p75
      %p77 = scmp.ne.s32.totalorder %s65, %s66
      %p78 = scmp.eq.s32.totalorder %s21, 1
      %p79 = por %p77, %p78
      %p81 = scmp.ne.s32.totalorder %s66, %s80
      %p82 = scmp.eq.s32.totalorder %s21, 0
      %p83 = por %p81, %p82
      %s84 = ssub.s32 %s22, %s34
      %s85 = ssub.s32 %s23, %s30
      %s86 = sor.u32 %s84, %s85
      %p87 = scmp.eq.s32.totalorder %s86, 0
      %s89 = sadd.s32 %s88, 1
      %s90 = scalar_select %p87, %s88, %s89
      %p93 = pneg %p87
      %p94 = scmp.eq.s32.totalorder %s15, 1
      %p95 = por %p93, %p94
      %p96 = scmp.ne.s32.totalorder %s88, %s91
      %p97 = scmp.eq.s32.totalorder %s15, 0
      %p98 = por %p96, %p97
      %p99 = scmp.ne.s32.totalorder %s88, %s91
      %p100 = scmp.eq.s32.totalorder %s20, 1
      %p101 = por %p99, %p100
      %p102 = scmp.ne.s32.totalorder %s91, %s92
      %p103 = scmp.eq.s32.totalorder %s20, 0
      %p104 = por %p102, %p103
      %p105 = scmp.ne.s32.totalorder %s91, %s92
      %p106 = scmp.eq.s32.totalorder %s21, 1
      %p107 = por %p105, %p106
      %p109 = scmp.ne.s32.totalorder %s92, %s108
      %p110 = scmp.eq.s32.totalorder %s21, 0
      %p111 = por %p109, %p110
      %p112 = scmp.le.s32.totalorder 1, %s15
      %p113 = scmp.lt.s32.totalorder %s15, 3
      %p114 = pnand %p112, %p113
      %p115 = pneg %p114
      // Predicated region
      $region9: #{tpu_custom_call.1} parent=5 // pred_check
        _
      $region10: #{tpu_custom_call.1} parent=5 // pred_check_branch
        %117 = sbr.rel (%p114) target = $region12
      $region11: #{tpu_custom_call.1} parent=5 // pred_region
        %s118 = ssub.s32 %s15, 1
        // Predicated region
        $region13: #{tpu_custom_call.1} parent=11 // pred_check
          %p119 = pneg %p76
        $region14: #{tpu_custom_call.1} parent=11 // pred_check_branch
          %121 = sbr.rel (%p119) target = $region16
        $region15: #{tpu_custom_call.1} parent=11 // pred_region
          %s123 = ssub.s32 1024, 1024
          %124 = vsyncadd [#allocation6], %s123
          %s125 = sshll.u32 [#allocation5], 4
          %s126 = int_to_ptr.vmem [resolvable:$true] %s125
          %131 = dma.hbm_to_vmem [thread:$0]  %s1, 1024, %s126, [#allocation6], 64, 64, 4
        $region16: #{tpu_custom_call.1} parent=11 // pred_fallthru
          _
      $region12: #{tpu_custom_call.1} parent=5 // pred_fallthru
        _
      %p132 = scmp.lt.s32.totalorder %s15, 2
      // Predicated region
      $region17: #{tpu_custom_call.1} parent=5 // pred_check
        %p133 = pneg %p132
      $region18: #{tpu_custom_call.1} parent=5 // pred_check_branch
        %135 = sbr.rel (%p133) target = $region20
      $region19: #{tpu_custom_call.1} parent=5 // pred_region
        // Predicated region
        $region21: #{tpu_custom_call.1} parent=19 // pred_check
          %p136 = pneg %p49
        $region22: #{tpu_custom_call.1} parent=19 // pred_check_branch
          %138 = sbr.rel (%p136) target = $region24
        $region23: #{tpu_custom_call.1} parent=19 // pred_region
          %s139 = sand.u32 %s39, 1
          %s140 = scalar_lea.sflag [#allocation3], %s139
          %s141 = sand.u32 %s39, 1
          %s142 = smul.addr %s141, 64
          %s143 = scalar_lea.vmem [#allocation2], %s142
          %s144 = smul.u32 2, %s23
          %s146 = ssub.s32 1024, 1024
          %147 = vsyncadd %s140, %s146
          %s148 = smul.addr %s22, 8
          %s149 = sadd.s32 %s144, %s148
          %s150 = smul.addr %s149, 128
          %s151 = scalar_lea.hbm %s0, %s150
          %s152 = sshll.u32 %s143, 4
          %s153 = int_to_ptr.vmem [resolvable:$true] %s152
          %158 = dma.hbm_to_vmem [thread:$0]  %s151, 1024, %s153, %s140, 256, 256, 16
        $region24: #{tpu_custom_call.1} parent=19 // pred_fallthru
          _
      $region20: #{tpu_custom_call.1} parent=5 // pred_fallthru
        _
      %p159 = scmp.le.s32.totalorder 1, %s15
      %p160 = scmp.lt.s32.totalorder %s15, 3
      %p161 = pnand %p159, %p160
      %p162 = pneg %p161
      // Predicated region
      $region25: #{tpu_custom_call.1} parent=5 // pred_check
        _
      $region26: #{tpu_custom_call.1} parent=5 // pred_check_branch
        %164 = sbr.rel (%p161) target = $region28
      $region27: #{tpu_custom_call.1} parent=5 // pred_region
        %s165 = ssub.s32 %s15, 1
        %s166 = sand.u32 %s42, 1
        %s167 = scalar_lea.sflag [#allocation3], %s166
        %s168 = sand.u32 %s42, 1
        %s169 = smul.addr %s168, 64
        %s170 = scalar_lea.vmem [#allocation2], %s169
        // Predicated region
        $region29: #{tpu_custom_call.1} parent=27 // pred_check
          %p171 = pneg %p55
        $region30: #{tpu_custom_call.1} parent=27 // pred_check_branch
          %173 = sbr.rel (%p171) target = $region32
        $region31: #{tpu_custom_call.1} parent=27 // pred_region
          %174 = dma.done %s167, 1024
        $region32: #{tpu_custom_call.1} parent=27 // pred_fallthru
          _
        // Predicated region
        $region33: #{tpu_custom_call.1} parent=27 // pred_check
          %p175 = pneg %p76
        $region34: #{tpu_custom_call.1} parent=27 // pred_check_branch
          %177 = sbr.rel (%p175) target = $region36
        $region35: #{tpu_custom_call.1} parent=27 // pred_region
          %178 = dma.done [#allocation6], 1024
        $region36: #{tpu_custom_call.1} parent=27 // pred_fallthru
          _
        %s179 = sand.u32 %s42, 1
        %s180 = scalar_lea.sflag [#allocation3], %s179
        %s181 = sand.u32 %s42, 1
        %s182 = smul.addr %s181, 64
        %s183 = scalar_lea.vmem [#allocation2], %s182
        %p184 = pneg %p55
        %p185 = pneg %p52
        %p186 = pneg %p76
        %p187 = pneg %p73
        %p188 = pneg %p104
        %p189 = pneg %p101
        %s190 = sand.u32 %s91, 1
        %s191 = scalar_lea.sflag [#allocation4], %s190
        %s192 = sand.u32 %s91, 1
        %s193 = smul.addr %s192, 1024
        %s194 = scalar_lea.vmem [#allocation7], %s193
        %s195 = smul.u32 2, %s25
        %s196 = smul.u32 32, %s25
        %v198 = vld [vmem:[%s170] sm:$0xff]
        %v199 = vld [vmem:[%s170 + $0x8] sm:$0xff]
        %v200 = vld [vmem:[%s170 + $0x10] sm:$0xff]
        %v201 = vld [vmem:[%s170 + $0x18] sm:$0xff]
        %v202 = vld [vmem:[%s170 + $0x20] sm:$0xff]
        %v203 = vld [vmem:[%s170 + $0x28] sm:$0xff]
        %v204 = vld [vmem:[%s170 + $0x30] sm:$0xff]
        %v205 = vld [vmem:[%s170 + $0x38] sm:$0xff]
        %v206 = vpack.c.bf16 %v200, %v198
        %v207 = vpack.c.bf16 %v201, %v199
        %v208 = vpack.c.bf16 %v204, %v202
        %v209 = vpack.c.bf16 %v205, %v203
        %v210 = vld [vmem:[#allocation5] sm:$0xf]
        %v211 = vld [vmem:[#allocation5 + $0x4] sm:$0xf]
        %v212 = vld [vmem:[#allocation5 + $0x8] sm:$0xf]
        %v213 = vld [vmem:[#allocation5 + $0xc] sm:$0xf]
        %214 = vxpose.xlu0.c.b16.start [1/8] %v206, 128
        %215 = vxpose.xlu0.c.b16.cont [2/8] %v208, 128
        %216 = vxpose.xlu0.c.b16.cont [3/8] 0, 128
        %217 = vxpose.xlu0.c.b16.cont [4/8] 0, 128
        %218 = vxpose.xlu0.c.b16.cont [5/8] 0, 128
        %219 = vxpose.xlu0.c.b16.cont [6/8] 0, 128
        %220 = vxpose.xlu0.c.b16.cont [7/8] 0, 128
        %221 = vxpose.xlu0.c.b16.end [8/8] 0, 128
        %v222 = vpop.trf.xlu0
        %v223 = vpop.trf.xlu0
        %v224 = vpop.trf.xlu0
        %v225 = vpop.trf.xlu0
        %v226 = vpop.trf.xlu0
        %v227 = vpop.trf.xlu0
        %v228 = vpop.trf.xlu0
        %v229 = vpop.trf.xlu0
        %230 = vxpose.xlu0.c.b16.start [1/8] %v207, 128
        %231 = vxpose.xlu0.c.b16.cont [2/8] %v209, 128
        %232 = vxpose.xlu0.c.b16.cont [3/8] 0, 128
        %233 = vxpose.xlu0.c.b16.cont [4/8] 0, 128
        %234 = vxpose.xlu0.c.b16.cont [5/8] 0, 128
        %235 = vxpose.xlu0.c.b16.cont [6/8] 0, 128
        %236 = vxpose.xlu0.c.b16.cont [7/8] 0, 128
        %237 = vxpose.xlu0.c.b16.end [8/8] 0, 128
        %v238 = vpop.trf.xlu0
        %v239 = vpop.trf.xlu0
        %v240 = vpop.trf.xlu0
        %v241 = vpop.trf.xlu0
        %v242 = vpop.trf.xlu0
        %v243 = vpop.trf.xlu0
        %v244 = vpop.trf.xlu0
        %v245 = vpop.trf.xlu0
        %v250 = vunpack.c.l.b16 %v210
        %v251 = vunpack.c.l.b16 %v211
        %v252 = vunpack.c.l.b16 %v212
        %v253 = vunpack.c.l.b16 %v213
        %v254 = vpack.c.b16 %v251, %v250
        %v255 = vpack.c.b16 %v253, %v252
        %vm258 = vcmask 261120
        %v260 = vsel %vm258, %v222, 0
        %v263 = vsel %vm258, %v223, 0
        %v266 = vsel %vm258, %v224, 0
        %v269 = vsel %vm258, %v225, 0
        %v272 = vsel %vm258, %v226, 0
        %v275 = vsel %vm258, %v227, 0
        %v278 = vsel %vm258, %v228, 0
        %v281 = vsel %vm258, %v229, 0
        %v284 = vsel %vm258, %v238, 0
        %v287 = vsel %vm258, %v239, 0
        %v290 = vsel %vm258, %v240, 0
        %v293 = vsel %vm258, %v241, 0
        %v296 = vsel %vm258, %v242, 0
        %v299 = vsel %vm258, %v243, 0
        %v302 = vsel %vm258, %v244, 0
        %v305 = vsel %vm258, %v245, 0
        %307 = vmatprep.subr.bf16.mxu0 0
        %308 = vmatpush1.bf16.msra.mxu0 %v254
        %309 = vmatprep.subr.bf16.mxu0 0
        %310 = vmatpush1.bf16.msra.mxu0 %v255
        %311 = vmatprep.subr.bf16.mxu0 0
        %312 = vmatpush1.bf16.msra.mxu0 0
        %313 = vmatprep.subr.bf16.mxu0 0
        %314 = vmatpush1.bf16.msra.mxu0 0
        %315 = vmatprep.subr.bf16.mxu0 0
        %316 = vmatpush1.bf16.msra.mxu0 0
        %317 = vmatprep.subr.bf16.mxu0 0
        %318 = vmatpush1.bf16.msra.mxu0 0
        %319 = vmatprep.subr.bf16.mxu0 0
        %320 = vmatpush1.bf16.msra.mxu0 0
        %321 = vmatprep.subr.bf16.mxu0 0
        %322 = vmatpush1.bf16.msra.mxu0 0
        %323 = vmatprep.subr.bf16.mxu0 0
        %324 = vmatpush1.bf16.msra.mxu0 0
        %325 = vmatprep.subr.bf16.mxu0 0
        %326 = vmatpush1.bf16.msra.mxu0 0
        %327 = vmatprep.subr.bf16.mxu0 0
        %328 = vmatpush1.bf16.msra.mxu0 0
        %329 = vmatprep.subr.bf16.mxu0 0
        %330 = vmatpush1.bf16.msra.mxu0 0
        %331 = vmatprep.subr.bf16.mxu0 0
        %332 = vmatpush1.bf16.msra.mxu0 0
        %333 = vmatprep.subr.bf16.mxu0 0
        %334 = vmatpush1.bf16.msra.mxu0 0
        %335 = vmatprep.subr.bf16.mxu0 0
        %336 = vmatpush1.bf16.msra.mxu0 0
        %337 = vmatprep.subr.bf16.mxu0 0
        %338 = vmatpush1.bf16.msra.mxu0 0
        %339 = vmatprep.mubr.bf16.mxu0 0
        %340 = vmatmul.mubr.bf16.gmra.mrb[0].mxu0 %v260
        %v341 = vpop.f32.mrb[0].mxu0
        %v342 = vadd.f32 0.0, %v341
        %v343 = vpop.f32.mrb[0].mxu0
        %v344 = vpop.f32.mrb[0].mxu0
        %v345 = vadd.f32 0.0, %v344
        %v346 = vpop.f32.mrb[0].mxu0
        %347 = vmatprep.mubr.bf16.mxu0 0
        %348 = vmatmul.mubr.bf16.gmra.mrb[0].mxu0 %v263
        %v349 = vpop.f32.mrb[0].mxu0
        %v350 = vadd.f32 0.0, %v349
        %v351 = vpop.f32.mrb[0].mxu0
        %v352 = vpop.f32.mrb[0].mxu0
        %v353 = vadd.f32 0.0, %v352
        %v354 = vpop.f32.mrb[0].mxu0
        %355 = vmatprep.mubr.bf16.mxu0 0
        %356 = vmatmul.mubr.bf16.gmra.mrb[0].mxu0 %v266
        %v357 = vpop.f32.mrb[0].mxu0
        %v358 = vadd.f32 0.0, %v357
        %v359 = vpop.f32.mrb[0].mxu0
        %v360 = vpop.f32.mrb[0].mxu0
        %v361 = vadd.f32 0.0, %v360
        %v362 = vpop.f32.mrb[0].mxu0
        %363 = vmatprep.mubr.bf16.mxu0 0
        %364 = vmatmul.mubr.bf16.gmra.mrb[0].mxu0 %v269
        %v365 = vpop.f32.mrb[0].mxu0
        %v366 = vadd.f32 0.0, %v365
        %v367 = vpop.f32.mrb[0].mxu0
        %v368 = vpop.f32.mrb[0].mxu0
        %v369 = vadd.f32 0.0, %v368
        %v370 = vpop.f32.mrb[0].mxu0
        %371 = vmatprep.mubr.bf16.mxu0 0
        %372 = vmatmul.mubr.bf16.gmra.mrb[0].mxu0 %v272
        %v373 = vpop.f32.mrb[0].mxu0
        %v374 = vadd.f32 0.0, %v373
        %v375 = vpop.f32.mrb[0].mxu0
        %v376 = vpop.f32.mrb[0].mxu0
        %v377 = vadd.f32 0.0, %v376
        %v378 = vpop.f32.mrb[0].mxu0
        %379 = vmatprep.mubr.bf16.mxu0 0
        %380 = vmatmul.mubr.bf16.gmra.mrb[0].mxu0 %v275
        %v381 = vpop.f32.mrb[0].mxu0
        %v382 = vadd.f32 0.0, %v381
        %v383 = vpop.f32.mrb[0].mxu0
        %v384 = vpop.f32.mrb[0].mxu0
        %v385 = vadd.f32 0.0, %v384
        %v386 = vpop.f32.mrb[0].mxu0
        %387 = vmatprep.mubr.bf16.mxu0 0
        %388 = vmatmul.mubr.bf16.gmra.mrb[0].mxu0 %v278
        %v389 = vpop.f32.mrb[0].mxu0
        %v390 = vadd.f32 0.0, %v389
        %v391 = vpop.f32.mrb[0].mxu0
        %v392 = vpop.f32.mrb[0].mxu0
        %v393 = vadd.f32 0.0, %v392
        %v394 = vpop.f32.mrb[0].mxu0
        %395 = vmatprep.mubr.bf16.mxu0 0
        %396 = vmatmul.mubr.bf16.gmra.mrb[0].mxu0 %v281
        %v397 = vpop.f32.mrb[0].mxu0
        %v398 = vadd.f32 0.0, %v397
        %v399 = vpop.f32.mrb[0].mxu0
        %v400 = vpop.f32.mrb[0].mxu0
        %v401 = vadd.f32 0.0, %v400
        %v402 = vpop.f32.mrb[0].mxu0
        %403 = vmatprep.mubr.bf16.mxu0 0
        %404 = vmatmul.mubr.bf16.gmra.mrb[0].mxu0 %v284
        %v405 = vpop.f32.mrb[0].mxu0
        %v406 = vadd.f32 0.0, %v405
        %v407 = vpop.f32.mrb[0].mxu0
        %v408 = vpop.f32.mrb[0].mxu0
        %v409 = vadd.f32 0.0, %v408
        %v410 = vpop.f32.mrb[0].mxu0
        %411 = vmatprep.mubr.bf16.mxu0 0
        %412 = vmatmul.mubr.bf16.gmra.mrb[0].mxu0 %v287
        %v413 = vpop.f32.mrb[0].mxu0
        %v414 = vadd.f32 0.0, %v413
        %v415 = vpop.f32.mrb[0].mxu0
        %v416 = vpop.f32.mrb[0].mxu0
        %v417 = vadd.f32 0.0, %v416
        %v418 = vpop.f32.mrb[0].mxu0
        %419 = vmatprep.mubr.bf16.mxu0 0
        %420 = vmatmul.mubr.bf16.gmra.mrb[0].mxu0 %v290
        %v421 = vpop.f32.mrb[0].mxu0
        %v422 = vadd.f32 0.0, %v421
        %v423 = vpop.f32.mrb[0].mxu0
        %v424 = vpop.f32.mrb[0].mxu0
        %v425 = vadd.f32 0.0, %v424
        %v426 = vpop.f32.mrb[0].mxu0
        %427 = vmatprep.mubr.bf16.mxu0 0
        %428 = vmatmul.mubr.bf16.gmra.mrb[0].mxu0 %v293
        %v429 = vpop.f32.mrb[0].mxu0
        %v430 = vadd.f32 0.0, %v429
        %v431 = vpop.f32.mrb[0].mxu0
        %v432 = vpop.f32.mrb[0].mxu0
        %v433 = vadd.f32 0.0, %v432
        %v434 = vpop.f32.mrb[0].mxu0
        %435 = vmatprep.mubr.bf16.mxu0 0
        %436 = vmatmul.mubr.bf16.gmra.mrb[0].mxu0 %v296
        %v437 = vpop.f32.mrb[0].mxu0
        %v438 = vadd.f32 0.0, %v437
        %v439 = vpop.f32.mrb[0].mxu0
        %v440 = vpop.f32.mrb[0].mxu0
        %v441 = vadd.f32 0.0, %v440
        %v442 = vpop.f32.mrb[0].mxu0
        %443 = vmatprep.mubr.bf16.mxu0 0
        %444 = vmatmul.mubr.bf16.gmra.mrb[0].mxu0 %v299
        %v445 = vpop.f32.mrb[0].mxu0
        %v446 = vadd.f32 0.0, %v445
        %v447 = vpop.f32.mrb[0].mxu0
        %v448 = vpop.f32.mrb[0].mxu0
        %v449 = vadd.f32 0.0, %v448
        %v450 = vpop.f32.mrb[0].mxu0
        %451 = vmatprep.mubr.bf16.mxu0 0
        %452 = vmatmul.mubr.bf16.gmra.mrb[0].mxu0 %v302
        %v453 = vpop.f32.mrb[0].mxu0
        %v454 = vadd.f32 0.0, %v453
        %v455 = vpop.f32.mrb[0].mxu0
        %v456 = vpop.f32.mrb[0].mxu0
        %v457 = vadd.f32 0.0, %v456
        %v458 = vpop.f32.mrb[0].mxu0
        %459 = vmatprep.mubr.bf16.mxu0 0
        %460 = vmatmul.mubr.bf16.gmra.mrb[0].mxu0 %v305
        %v461 = vpop.f32.mrb[0].mxu0
        %v462 = vadd.f32 0.0, %v461
        %v463 = vpop.f32.mrb[0].mxu0
        %v464 = vpop.f32.mrb[0].mxu0
        %v465 = vadd.f32 0.0, %v464
        %v466 = vpop.f32.mrb[0].mxu0
        %467 = vdwg.mxu0
        %468 = vst [vmem:[%s194] sm:$0xff] %v342
        %469 = vst [vmem:[%s194 + $0x8] sm:$0xff] %v345
        %470 = vst [vmem:[%s194 + $0x10] sm:$0xff] %v350
        %471 = vst [vmem:[%s194 + $0x18] sm:$0xff] %v353
        %472 = vst [vmem:[%s194 + $0x20] sm:$0xff] %v358
        %473 = vst [vmem:[%s194 + $0x28] sm:$0xff] %v361
        %474 = vst [vmem:[%s194 + $0x30] sm:$0xff] %v366
        %475 = vst [vmem:[%s194 + $0x38] sm:$0xff] %v369
        %476 = vst [vmem:[%s194 + $0x40] sm:$0xff] %v374
        %477 = vst [vmem:[%s194 + $0x48] sm:$0xff] %v377
        %478 = vst [vmem:[%s194 + $0x50] sm:$0xff] %v382
        %479 = vst [vmem:[%s194 + $0x58] sm:$0xff] %v385
        %480 = vst [vmem:[%s194 + $0x60] sm:$0xff] %v390
        %481 = vst [vmem:[%s194 + $0x68] sm:$0xff] %v393
        %482 = vst [vmem:[%s194 + $0x70] sm:$0xff] %v398
        %483 = vst [vmem:[%s194 + $0x78] sm:$0xff] %v401
        %484 = vst [vmem:[%s194 + $0x80] sm:$0xff] %v406
        %485 = vst [vmem:[%s194 + $0x88] sm:$0xff] %v409
        %486 = vst [vmem:[%s194 + $0x90] sm:$0xff] %v414
        %487 = vst [vmem:[%s194 + $0x98] sm:$0xff] %v417
        %488 = vst [vmem:[%s194 + $0xa0] sm:$0xff] %v422
        %489 = vst [vmem:[%s194 + $0xa8] sm:$0xff] %v425
        %490 = vst [vmem:[%s194 + $0xb0] sm:$0xff] %v430
        %491 = vst [vmem:[%s194 + $0xb8] sm:$0xff] %v433
        %492 = vst [vmem:[%s194 + $0xc0] sm:$0xff] %v438
        %493 = vst [vmem:[%s194 + $0xc8] sm:$0xff] %v441
        %494 = vst [vmem:[%s194 + $0xd0] sm:$0xff] %v446
        %495 = vst [vmem:[%s194 + $0xd8] sm:$0xff] %v449
        %496 = vst [vmem:[%s194 + $0xe0] sm:$0xff] %v454
        %497 = vst [vmem:[%s194 + $0xe8] sm:$0xff] %v457
        %498 = vst [vmem:[%s194 + $0xf0] sm:$0xff] %v462
        %499 = vst [vmem:[%s194 + $0xf8] sm:$0xff] %v465
        %s500 = scalar_lea.vmem [#allocation5], 16
        %v501 = vld [vmem:[%s500] sm:$0xf]
        %v502 = vld [vmem:[%s500 + $0x4] sm:$0xf]
        %v503 = vld [vmem:[%s500 + $0x8] sm:$0xf]
        %v504 = vld [vmem:[%s500 + $0xc] sm:$0xf]
        %v509 = vunpack.c.l.b16 %v501
        %v510 = vunpack.c.l.b16 %v502
        %v511 = vunpack.c.l.b16 %v503
        %v512 = vunpack.c.l.b16 %v504
        %v513 = vpack.c.b16 %v510, %v509
        %v514 = vpack.c.b16 %v512, %v511
        %517 = vmatprep.subr.bf16.mxu0 0
        %518 = vmatpush1.bf16.msra.mxu0 %v513
        %519 = vmatprep.subr.bf16.mxu0 0
        %520 = vmatpush1.bf16.msra.mxu0 %v514
        %521 = vmatprep.subr.bf16.mxu0 0
        %522 = vmatpush1.bf16.msra.mxu0 0
        %523 = vmatprep.subr.bf16.mxu0 0
        %524 = vmatpush1.bf16.msra.mxu0 0
        %525 = vmatprep.subr.bf16.mxu0 0
        %526 = vmatpush1.bf16.msra.mxu0 0
        %527 = vmatprep.subr.bf16.mxu0 0
        %528 = vmatpush1.bf16.msra.mxu0 0
        %529 = vmatprep.subr.bf16.mxu0 0
        %530 = vmatpush1.bf16.msra.mxu0 0
        %531 = vmatprep.subr.bf16.mxu0 0
        %532 = vmatpush1.bf16.msra.mxu0 0
        %533 = vmatprep.subr.bf16.mxu0 0
        %534 = vmatpush1.bf16.msra.mxu0 0
        %535 = vmatprep.subr.bf16.mxu0 0
        %536 = vmatpush1.bf16.msra.mxu0 0
        %537 = vmatprep.subr.bf16.mxu0 0
        %538 = vmatpush1.bf16.msra.mxu0 0
        %539 = vmatprep.subr.bf16.mxu0 0
        %540 = vmatpush1.bf16.msra.mxu0 0
        %541 = vmatprep.subr.bf16.mxu0 0
        %542 = vmatpush1.bf16.msra.mxu0 0
        %543 = vmatprep.subr.bf16.mxu0 0
        %544 = vmatpush1.bf16.msra.mxu0 0
        %545 = vmatprep.subr.bf16.mxu0 0
        %546 = vmatpush1.bf16.msra.mxu0 0
        %547 = vmatprep.subr.bf16.mxu0 0
        %548 = vmatpush1.bf16.msra.mxu0 0
        %549 = vmatprep.mubr.bf16.mxu0 0
        %550 = vmatmul.mubr.bf16.gmra.mrb[0].mxu0 %v260
        %v551 = vpop.f32.mrb[0].mxu0
        %v552 = vadd.f32 0.0, %v551
        %v553 = vpop.f32.mrb[0].mxu0
        %v554 = vpop.f32.mrb[0].mxu0
        %v555 = vadd.f32 0.0, %v554
        %v556 = vpop.f32.mrb[0].mxu0
        %557 = vmatprep.mubr.bf16.mxu0 0
        %558 = vmatmul.mubr.bf16.gmra.mrb[0].mxu0 %v263
        %v559 = vpop.f32.mrb[0].mxu0
        %v560 = vadd.f32 0.0, %v559
        %v561 = vpop.f32.mrb[0].mxu0
        %v562 = vpop.f32.mrb[0].mxu0
        %v563 = vadd.f32 0.0, %v562
        %v564 = vpop.f32.mrb[0].mxu0
        %565 = vmatprep.mubr.bf16.mxu0 0
        %566 = vmatmul.mubr.bf16.gmra.mrb[0].mxu0 %v266
        %v567 = vpop.f32.mrb[0].mxu0
        %v568 = vadd.f32 0.0, %v567
        %v569 = vpop.f32.mrb[0].mxu0
        %v570 = vpop.f32.mrb[0].mxu0
        %v571 = vadd.f32 0.0, %v570
        %v572 = vpop.f32.mrb[0].mxu0
        %573 = vmatprep.mubr.bf16.mxu0 0
        %574 = vmatmul.mubr.bf16.gmra.mrb[0].mxu0 %v269
        %v575 = vpop.f32.mrb[0].mxu0
        %v576 = vadd.f32 0.0, %v575
        %v577 = vpop.f32.mrb[0].mxu0
        %v578 = vpop.f32.mrb[0].mxu0
        %v579 = vadd.f32 0.0, %v578
        %v580 = vpop.f32.mrb[0].mxu0
        %581 = vmatprep.mubr.bf16.mxu0 0
        %582 = vmatmul.mubr.bf16.gmra.mrb[0].mxu0 %v272
        %v583 = vpop.f32.mrb[0].mxu0
        %v584 = vadd.f32 0.0, %v583
        %v585 = vpop.f32.mrb[0].mxu0
        %v586 = vpop.f32.mrb[0].mxu0
        %v587 = vadd.f32 0.0, %v586
        %v588 = vpop.f32.mrb[0].mxu0
        %589 = vmatprep.mubr.bf16.mxu0 0
        %590 = vmatmul.mubr.bf16.gmra.mrb[0].mxu0 %v275
        %v591 = vpop.f32.mrb[0].mxu0
        %v592 = vadd.f32 0.0, %v591
        %v593 = vpop.f32.mrb[0].mxu0
        %v594 = vpop.f32.mrb[0].mxu0
        %v595 = vadd.f32 0.0, %v594
        %v596 = vpop.f32.mrb[0].mxu0
        %597 = vmatprep.mubr.bf16.mxu0 0
        %598 = vmatmul.mubr.bf16.gmra.mrb[0].mxu0 %v278
        %v599 = vpop.f32.mrb[0].mxu0
        %v600 = vadd.f32 0.0, %v599
        %v601 = vpop.f32.mrb[0].mxu0
        %v602 = vpop.f32.mrb[0].mxu0
        %v603 = vadd.f32 0.0, %v602
        %v604 = vpop.f32.mrb[0].mxu0
        %605 = vmatprep.mubr.bf16.mxu0 0
        %606 = vmatmul.mubr.bf16.gmra.mrb[0].mxu0 %v281
        %v607 = vpop.f32.mrb[0].mxu0
        %v608 = vadd.f32 0.0, %v607
        %v609 = vpop.f32.mrb[0].mxu0
        %v610 = vpop.f32.mrb[0].mxu0
        %v611 = vadd.f32 0.0, %v610
        %v612 = vpop.f32.mrb[0].mxu0
        %613 = vmatprep.mubr.bf16.mxu0 0
        %614 = vmatmul.mubr.bf16.gmra.mrb[0].mxu0 %v284
        %v615 = vpop.f32.mrb[0].mxu0
        %v616 = vadd.f32 0.0, %v615
        %v617 = vpop.f32.mrb[0].mxu0
        %v618 = vpop.f32.mrb[0].mxu0
        %v619 = vadd.f32 0.0, %v618
        %v620 = vpop.f32.mrb[0].mxu0
        %621 = vmatprep.mubr.bf16.mxu0 0
        %622 = vmatmul.mubr.bf16.gmra.mrb[0].mxu0 %v287
        %v623 = vpop.f32.mrb[0].mxu0
        %v624 = vadd.f32 0.0, %v623
        %v625 = vpop.f32.mrb[0].mxu0
        %v626 = vpop.f32.mrb[0].mxu0
        %v627 = vadd.f32 0.0, %v626
        %v628 = vpop.f32.mrb[0].mxu0
        %629 = vmatprep.mubr.bf16.mxu0 0
        %630 = vmatmul.mubr.bf16.gmra.mrb[0].mxu0 %v290
        %v631 = vpop.f32.mrb[0].mxu0
        %v632 = vadd.f32 0.0, %v631
        %v633 = vpop.f32.mrb[0].mxu0
        %v634 = vpop.f32.mrb[0].mxu0
        %v635 = vadd.f32 0.0, %v634
        %v636 = vpop.f32.mrb[0].mxu0
        %637 = vmatprep.mubr.bf16.mxu0 0
        %638 = vmatmul.mubr.bf16.gmra.mrb[0].mxu0 %v293
        %v639 = vpop.f32.mrb[0].mxu0
        %v640 = vadd.f32 0.0, %v639
        %v641 = vpop.f32.mrb[0].mxu0
        %v642 = vpop.f32.mrb[0].mxu0
        %v643 = vadd.f32 0.0, %v642
        %v644 = vpop.f32.mrb[0].mxu0
        %645 = vmatprep.mubr.bf16.mxu0 0
        %646 = vmatmul.mubr.bf16.gmra.mrb[0].mxu0 %v296
        %v647 = vpop.f32.mrb[0].mxu0
        %v648 = vadd.f32 0.0, %v647
        %v649 = vpop.f32.mrb[0].mxu0
        %v650 = vpop.f32.mrb[0].mxu0
        %v651 = vadd.f32 0.0, %v650
        %v652 = vpop.f32.mrb[0].mxu0
        %653 = vmatprep.mubr.bf16.mxu0 0
        %654 = vmatmul.mubr.bf16.gmra.mrb[0].mxu0 %v299
        %v655 = vpop.f32.mrb[0].mxu0
        %v656 = vadd.f32 0.0, %v655
        %v657 = vpop.f32.mrb[0].mxu0
        %v658 = vpop.f32.mrb[0].mxu0
        %v659 = vadd.f32 0.0, %v658
        %v660 = vpop.f32.mrb[0].mxu0
        %661 = vmatprep.mubr.bf16.mxu0 0
        %662 = vmatmul.mubr.bf16.gmra.mrb[0].mxu0 %v302
        %v663 = vpop.f32.mrb[0].mxu0
        %v664 = vadd.f32 0.0, %v663
        %v665 = vpop.f32.mrb[0].mxu0
        %v666 = vpop.f32.mrb[0].mxu0
        %v667 = vadd.f32 0.0, %v666
        %v668 = vpop.f32.mrb[0].mxu0
        %669 = vmatprep.mubr.bf16.mxu0 0
        %670 = vmatmul.mubr.bf16.gmra.mrb[0].mxu0 %v305
        %v671 = vpop.f32.mrb[0].mxu0
        %v672 = vadd.f32 0.0, %v671
        %v673 = vpop.f32.mrb[0].mxu0
        %v674 = vpop.f32.mrb[0].mxu0
        %v675 = vadd.f32 0.0, %v674
        %v676 = vpop.f32.mrb[0].mxu0
        %677 = vdwg.mxu0
        %s678 = scalar_lea.vmem %s194, 256 [#allocation7]
        %679 = vst [vmem:[%s678] sm:$0xff] %v552
        %680 = vst [vmem:[%s678 + $0x8] sm:$0xff] %v555
        %681 = vst [vmem:[%s678 + $0x10] sm:$0xff] %v560
        %682 = vst [vmem:[%s678 + $0x18] sm:$0xff] %v563
        %683 = vst [vmem:[%s678 + $0x20] sm:$0xff] %v568
        %684 = vst [vmem:[%s678 + $0x28] sm:$0xff] %v571
        %685 = vst [vmem:[%s678 + $0x30] sm:$0xff] %v576
        %686 = vst [vmem:[%s678 + $0x38] sm:$0xff] %v579
        %687 = vst [vmem:[%s678 + $0x40] sm:$0xff] %v584
        %688 = vst [vmem:[%s678 + $0x48] sm:$0xff] %v587
        %689 = vst [vmem:[%s678 + $0x50] sm:$0xff] %v592
        %690 = vst [vmem:[%s678 + $0x58] sm:$0xff] %v595
        %691 = vst [vmem:[%s678 + $0x60] sm:$0xff] %v600
        %692 = vst [vmem:[%s678 + $0x68] sm:$0xff] %v603
        %693 = vst [vmem:[%s678 + $0x70] sm:$0xff] %v608
        %694 = vst [vmem:[%s678 + $0x78] sm:$0xff] %v611
        %695 = vst [vmem:[%s678 + $0x80] sm:$0xff] %v616
        %696 = vst [vmem:[%s678 + $0x88] sm:$0xff] %v619
        %697 = vst [vmem:[%s678 + $0x90] sm:$0xff] %v624
        %698 = vst [vmem:[%s678 + $0x98] sm:$0xff] %v627
        %699 = vst [vmem:[%s678 + $0xa0] sm:$0xff] %v632
        %700 = vst [vmem:[%s678 + $0xa8] sm:$0xff] %v635
        %701 = vst [vmem:[%s678 + $0xb0] sm:$0xff] %v640
        %702 = vst [vmem:[%s678 + $0xb8] sm:$0xff] %v643
        %703 = vst [vmem:[%s678 + $0xc0] sm:$0xff] %v648
        %704 = vst [vmem:[%s678 + $0xc8] sm:$0xff] %v651
        %705 = vst [vmem:[%s678 + $0xd0] sm:$0xff] %v656
        %706 = vst [vmem:[%s678 + $0xd8] sm:$0xff] %v659
        %707 = vst [vmem:[%s678 + $0xe0] sm:$0xff] %v664
        %708 = vst [vmem:[%s678 + $0xe8] sm:$0xff] %v667
        %709 = vst [vmem:[%s678 + $0xf0] sm:$0xff] %v672
        %710 = vst [vmem:[%s678 + $0xf8] sm:$0xff] %v675
        %s711 = scalar_lea.vmem [#allocation5], 32
        %v712 = vld [vmem:[%s711] sm:$0xf]
        %v713 = vld [vmem:[%s711 + $0x4] sm:$0xf]
        %v714 = vld [vmem:[%s711 + $0x8] sm:$0xf]
        %v715 = vld [vmem:[%s711 + $0xc] sm:$0xf]
        %v720 = vunpack.c.l.b16 %v712
        %v721 = vunpack.c.l.b16 %v713
        %v722 = vunpack.c.l.b16 %v714
        %v723 = vunpack.c.l.b16 %v715
        %v724 = vpack.c.b16 %v721, %v720
        %v725 = vpack.c.b16 %v723, %v722
        %728 = vmatprep.subr.bf16.mxu0 0
        %729 = vmatpush1.bf16.msra.mxu0 %v724
        %730 = vmatprep.subr.bf16.mxu0 0
        %731 = vmatpush1.bf16.msra.mxu0 %v725
        %732 = vmatprep.subr.bf16.mxu0 0
        %733 = vmatpush1.bf16.msra.mxu0 0
        %734 = vmatprep.subr.bf16.mxu0 0
        %735 = vmatpush1.bf16.msra.mxu0 0
        %736 = vmatprep.subr.bf16.mxu0 0
        %737 = vmatpush1.bf16.msra.mxu0 0
        %738 = vmatprep.subr.bf16.mxu0 0
        %739 = vmatpush1.bf16.msra.mxu0 0
        %740 = vmatprep.subr.bf16.mxu0 0
        %741 = vmatpush1.bf16.msra.mxu0 0
        %742 = vmatprep.subr.bf16.mxu0 0
        %743 = vmatpush1.bf16.msra.mxu0 0
        %744 = vmatprep.subr.bf16.mxu0 0
        %745 = vmatpush1.bf16.msra.mxu0 0
        %746 = vmatprep.subr.bf16.mxu0 0
        %747 = vmatpush1.bf16.msra.mxu0 0
        %748 = vmatprep.subr.bf16.mxu0 0
        %749 = vmatpush1.bf16.msra.mxu0 0
        %750 = vmatprep.subr.bf16.mxu0 0
        %751 = vmatpush1.bf16.msra.mxu0 0
        %752 = vmatprep.subr.bf16.mxu0 0
        %753 = vmatpush1.bf16.msra.mxu0 0
        %754 = vmatprep.subr.bf16.mxu0 0
        %755 = vmatpush1.bf16.msra.mxu0 0
        %756 = vmatprep.subr.bf16.mxu0 0
        %757 = vmatpush1.bf16.msra.mxu0 0
        %758 = vmatprep.subr.bf16.mxu0 0
        %759 = vmatpush1.bf16.msra.mxu0 0
        %760 = vmatprep.mubr.bf16.mxu0 0
        %761 = vmatmul.mubr.bf16.gmra.mrb[0].mxu0 %v260
        %v762 = vpop.f32.mrb[0].mxu0
        %v763 = vadd.f32 0.0, %v762
        %v764 = vpop.f32.mrb[0].mxu0
        %v765 = vpop.f32.mrb[0].mxu0
        %v766 = vadd.f32 0.0, %v765
        %v767 = vpop.f32.mrb[0].mxu0
        %768 = vmatprep.mubr.bf16.mxu0 0
        %769 = vmatmul.mubr.bf16.gmra.mrb[0].mxu0 %v263
        %v770 = vpop.f32.mrb[0].mxu0
        %v771 = vadd.f32 0.0, %v770
        %v772 = vpop.f32.mrb[0].mxu0
        %v773 = vpop.f32.mrb[0].mxu0
        %v774 = vadd.f32 0.0, %v773
        %v775 = vpop.f32.mrb[0].mxu0
        %776 = vmatprep.mubr.bf16.mxu0 0
        %777 = vmatmul.mubr.bf16.gmra.mrb[0].mxu0 %v266
        %v778 = vpop.f32.mrb[0].mxu0
        %v779 = vadd.f32 0.0, %v778
        %v780 = vpop.f32.mrb[0].mxu0
        %v781 = vpop.f32.mrb[0].mxu0
        %v782 = vadd.f32 0.0, %v781
        %v783 = vpop.f32.mrb[0].mxu0
        %784 = vmatprep.mubr.bf16.mxu0 0
        %785 = vmatmul.mubr.bf16.gmra.mrb[0].mxu0 %v269
        %v786 = vpop.f32.mrb[0].mxu0
        %v787 = vadd.f32 0.0, %v786
        %v788 = vpop.f32.mrb[0].mxu0
        %v789 = vpop.f32.mrb[0].mxu0
        %v790 = vadd.f32 0.0, %v789
        %v791 = vpop.f32.mrb[0].mxu0
        %792 = vmatprep.mubr.bf16.mxu0 0
        %793 = vmatmul.mubr.bf16.gmra.mrb[0].mxu0 %v272
        %v794 = vpop.f32.mrb[0].mxu0
        %v795 = vadd.f32 0.0, %v794
        %v796 = vpop.f32.mrb[0].mxu0
        %v797 = vpop.f32.mrb[0].mxu0
        %v798 = vadd.f32 0.0, %v797
        %v799 = vpop.f32.mrb[0].mxu0
        %800 = vmatprep.mubr.bf16.mxu0 0
        %801 = vmatmul.mubr.bf16.gmra.mrb[0].mxu0 %v275
        %v802 = vpop.f32.mrb[0].mxu0
        %v803 = vadd.f32 0.0, %v802
        %v804 = vpop.f32.mrb[0].mxu0
        %v805 = vpop.f32.mrb[0].mxu0
        %v806 = vadd.f32 0.0, %v805
        %v807 = vpop.f32.mrb[0].mxu0
        %808 = vmatprep.mubr.bf16.mxu0 0
        %809 = vmatmul.mubr.bf16.gmra.mrb[0].mxu0 %v278
        %v810 = vpop.f32.mrb[0].mxu0
        %v811 = vadd.f32 0.0, %v810
        %v812 = vpop.f32.mrb[0].mxu0
        %v813 = vpop.f32.mrb[0].mxu0
        %v814 = vadd.f32 0.0, %v813
        %v815 = vpop.f32.mrb[0].mxu0
        %816 = vmatprep.mubr.bf16.mxu0 0
        %817 = vmatmul.mubr.bf16.gmra.mrb[0].mxu0 %v281
        %v818 = vpop.f32.mrb[0].mxu0
        %v819 = vadd.f32 0.0, %v818
        %v820 = vpop.f32.mrb[0].mxu0
        %v821 = vpop.f32.mrb[0].mxu0
        %v822 = vadd.f32 0.0, %v821
        %v823 = vpop.f32.mrb[0].mxu0
        %824 = vmatprep.mubr.bf16.mxu0 0
        %825 = vmatmul.mubr.bf16.gmra.mrb[0].mxu0 %v284
        %v826 = vpop.f32.mrb[0].mxu0
        %v827 = vadd.f32 0.0, %v826
        %v828 = vpop.f32.mrb[0].mxu0
        %v829 = vpop.f32.mrb[0].mxu0
        %v830 = vadd.f32 0.0, %v829
        %v831 = vpop.f32.mrb[0].mxu0
        %832 = vmatprep.mubr.bf16.mxu0 0
        %833 = vmatmul.mubr.bf16.gmra.mrb[0].mxu0 %v287
        %v834 = vpop.f32.mrb[0].mxu0
        %v835 = vadd.f32 0.0, %v834
        %v836 = vpop.f32.mrb[0].mxu0
        %v837 = vpop.f32.mrb[0].mxu0
        %v838 = vadd.f32 0.0, %v837
        %v839 = vpop.f32.mrb[0].mxu0
        %840 = vmatprep.mubr.bf16.mxu0 0
        %841 = vmatmul.mubr.bf16.gmra.mrb[0].mxu0 %v290
        %v842 = vpop.f32.mrb[0].mxu0
        %v843 = vadd.f32 0.0, %v842
        %v844 = vpop.f32.mrb[0].mxu0
        %v845 = vpop.f32.mrb[0].mxu0
        %v846 = vadd.f32 0.0, %v845
        %v847 = vpop.f32.mrb[0].mxu0
        %848 = vmatprep.mubr.bf16.mxu0 0
        %849 = vmatmul.mubr.bf16.gmra.mrb[0].mxu0 %v293
        %v850 = vpop.f32.mrb[0].mxu0
        %v851 = vadd.f32 0.0, %v850
        %v852 = vpop.f32.mrb[0].mxu0
        %v853 = vpop.f32.mrb[0].mxu0
        %v854 = vadd.f32 0.0, %v853
        %v855 = vpop.f32.mrb[0].mxu0
        %856 = vmatprep.mubr.bf16.mxu0 0
        %857 = vmatmul.mubr.bf16.gmra.mrb[0].mxu0 %v296
        %v858 = vpop.f32.mrb[0].mxu0
        %v859 = vadd.f32 0.0, %v858
        %v860 = vpop.f32.mrb[0].mxu0
        %v861 = vpop.f32.mrb[0].mxu0
        %v862 = vadd.f32 0.0, %v861
        %v863 = vpop.f32.mrb[0].mxu0
        %864 = vmatprep.mubr.bf16.mxu0 0
        %865 = vmatmul.mubr.bf16.gmra.mrb[0].mxu0 %v299
        %v866 = vpop.f32.mrb[0].mxu0
        %v867 = vadd.f32 0.0, %v866
        %v868 = vpop.f32.mrb[0].mxu0
        %v869 = vpop.f32.mrb[0].mxu0
        %v870 = vadd.f32 0.0, %v869
        %v871 = vpop.f32.mrb[0].mxu0
        %872 = vmatprep.mubr.bf16.mxu0 0
        %873 = vmatmul.mubr.bf16.gmra.mrb[0].mxu0 %v302
        %v874 = vpop.f32.mrb[0].mxu0
        %v875 = vadd.f32 0.0, %v874
        %v876 = vpop.f32.mrb[0].mxu0
        %v877 = vpop.f32.mrb[0].mxu0
        %v878 = vadd.f32 0.0, %v877
        %v879 = vpop.f32.mrb[0].mxu0
        %880 = vmatprep.mubr.bf16.mxu0 0
        %881 = vmatmul.mubr.bf16.gmra.mrb[0].mxu0 %v305
        %v882 = vpop.f32.mrb[0].mxu0
        %v883 = vadd.f32 0.0, %v882
        %v884 = vpop.f32.mrb[0].mxu0
        %v885 = vpop.f32.mrb[0].mxu0
        %v886 = vadd.f32 0.0, %v885
        %v887 = vpop.f32.mrb[0].mxu0
        %888 = vdwg.mxu0
        %s889 = scalar_lea.vmem %s194, 512 [#allocation7]
        %890 = vst [vmem:[%s889] sm:$0xff] %v763
        %891 = vst [vmem:[%s889 + $0x8] sm:$0xff] %v766
        %892 = vst [vmem:[%s889 + $0x10] sm:$0xff] %v771
        %893 = vst [vmem:[%s889 + $0x18] sm:$0xff] %v774
        %894 = vst [vmem:[%s889 + $0x20] sm:$0xff] %v779
        %895 = vst [vmem:[%s889 + $0x28] sm:$0xff] %v782
        %896 = vst [vmem:[%s889 + $0x30] sm:$0xff] %v787
        %897 = vst [vmem:[%s889 + $0x38] sm:$0xff] %v790
        %898 = vst [vmem:[%s889 + $0x40] sm:$0xff] %v795
        %899 = vst [vmem:[%s889 + $0x48] sm:$0xff] %v798
        %900 = vst [vmem:[%s889 + $0x50] sm:$0xff] %v803
        %901 = vst [vmem:[%s889 + $0x58] sm:$0xff] %v806
        %902 = vst [vmem:[%s889 + $0x60] sm:$0xff] %v811
        %903 = vst [vmem:[%s889 + $0x68] sm:$0xff] %v814
        %904 = vst [vmem:[%s889 + $0x70] sm:$0xff] %v819
        %905 = vst [vmem:[%s889 + $0x78] sm:$0xff] %v822
        %906 = vst [vmem:[%s889 + $0x80] sm:$0xff] %v827
        %907 = vst [vmem:[%s889 + $0x88] sm:$0xff] %v830
        %908 = vst [vmem:[%s889 + $0x90] sm:$0xff] %v835
        %909 = vst [vmem:[%s889 + $0x98] sm:$0xff] %v838
        %910 = vst [vmem:[%s889 + $0xa0] sm:$0xff] %v843
        %911 = vst [vmem:[%s889 + $0xa8] sm:$0xff] %v846
        %912 = vst [vmem:[%s889 + $0xb0] sm:$0xff] %v851
        %913 = vst [vmem:[%s889 + $0xb8] sm:$0xff] %v854
        %914 = vst [vmem:[%s889 + $0xc0] sm:$0xff] %v859
        %915 = vst [vmem:[%s889 + $0xc8] sm:$0xff] %v862
        %916 = vst [vmem:[%s889 + $0xd0] sm:$0xff] %v867
        %917 = vst [vmem:[%s889 + $0xd8] sm:$0xff] %v870
        %918 = vst [vmem:[%s889 + $0xe0] sm:$0xff] %v875
        %919 = vst [vmem:[%s889 + $0xe8] sm:$0xff] %v878
        %920 = vst [vmem:[%s889 + $0xf0] sm:$0xff] %v883
        %921 = vst [vmem:[%s889 + $0xf8] sm:$0xff] %v886
        %s922 = scalar_lea.vmem [#allocation5], 48
        %v923 = vld [vmem:[%s922] sm:$0xf]
        %v924 = vld [vmem:[%s922 + $0x4] sm:$0xf]
        %v925 = vld [vmem:[%s922 + $0x8] sm:$0xf]
        %v926 = vld [vmem:[%s922 + $0xc] sm:$0xf]
        %v931 = vunpack.c.l.b16 %v923
        %v932 = vunpack.c.l.b16 %v924
        %v933 = vunpack.c.l.b16 %v925
        %v934 = vunpack.c.l.b16 %v926
        %v935 = vpack.c.b16 %v932, %v931
        %v936 = vpack.c.b16 %v934, %v933
        %939 = vmatprep.subr.bf16.mxu0 0
        %940 = vmatpush1.bf16.msra.mxu0 %v935
        %941 = vmatprep.subr.bf16.mxu0 0
        %942 = vmatpush1.bf16.msra.mxu0 %v936
        %943 = vmatprep.subr.bf16.mxu0 0
        %944 = vmatpush1.bf16.msra.mxu0 0
        %945 = vmatprep.subr.bf16.mxu0 0
        %946 = vmatpush1.bf16.msra.mxu0 0
        %947 = vmatprep.subr.bf16.mxu0 0
        %948 = vmatpush1.bf16.msra.mxu0 0
        %949 = vmatprep.subr.bf16.mxu0 0
        %950 = vmatpush1.bf16.msra.mxu0 0
        %951 = vmatprep.subr.bf16.mxu0 0
        %952 = vmatpush1.bf16.msra.mxu0 0
        %953 = vmatprep.subr.bf16.mxu0 0
        %954 = vmatpush1.bf16.msra.mxu0 0
        %955 = vmatprep.subr.bf16.mxu0 0
        %956 = vmatpush1.bf16.msra.mxu0 0
        %957 = vmatprep.subr.bf16.mxu0 0
        %958 = vmatpush1.bf16.msra.mxu0 0
        %959 = vmatprep.subr.bf16.mxu0 0
        %960 = vmatpush1.bf16.msra.mxu0 0
        %961 = vmatprep.subr.bf16.mxu0 0
        %962 = vmatpush1.bf16.msra.mxu0 0
        %963 = vmatprep.subr.bf16.mxu0 0
        %964 = vmatpush1.bf16.msra.mxu0 0
        %965 = vmatprep.subr.bf16.mxu0 0
        %966 = vmatpush1.bf16.msra.mxu0 0
        %967 = vmatprep.subr.bf16.mxu0 0
        %968 = vmatpush1.bf16.msra.mxu0 0
        %969 = vmatprep.subr.bf16.mxu0 0
        %970 = vmatpush1.bf16.msra.mxu0 0
        %971 = vmatprep.mubr.bf16.mxu0 0
        %972 = vmatmul.mubr.bf16.gmra.mrb[0].mxu0 %v260
        %v973 = vpop.f32.mrb[0].mxu0
        %v974 = vadd.f32 0.0, %v973
        %v975 = vpop.f32.mrb[0].mxu0
        %v976 = vpop.f32.mrb[0].mxu0
        %v977 = vadd.f32 0.0, %v976
        %v978 = vpop.f32.mrb[0].mxu0
        %979 = vmatprep.mubr.bf16.mxu0 0
        %980 = vmatmul.mubr.bf16.gmra.mrb[0].mxu0 %v263
        %v981 = vpop.f32.mrb[0].mxu0
        %v982 = vadd.f32 0.0, %v981
        %v983 = vpop.f32.mrb[0].mxu0
        %v984 = vpop.f32.mrb[0].mxu0
        %v985 = vadd.f32 0.0, %v984
        %v986 = vpop.f32.mrb[0].mxu0
        %987 = vmatprep.mubr.bf16.mxu0 0
        %988 = vmatmul.mubr.bf16.gmra.mrb[0].mxu0 %v266
        %v989 = vpop.f32.mrb[0].mxu0
        %v990 = vadd.f32 0.0, %v989
        %v991 = vpop.f32.mrb[0].mxu0
        %v992 = vpop.f32.mrb[0].mxu0
        %v993 = vadd.f32 0.0, %v992
        %v994 = vpop.f32.mrb[0].mxu0
        %995 = vmatprep.mubr.bf16.mxu0 0
        %996 = vmatmul.mubr.bf16.gmra.mrb[0].mxu0 %v269
        %v997 = vpop.f32.mrb[0].mxu0
        %v998 = vadd.f32 0.0, %v997
        %v999 = vpop.f32.mrb[0].mxu0
        %v1000 = vpop.f32.mrb[0].mxu0
        %v1001 = vadd.f32 0.0, %v1000
        %v1002 = vpop.f32.mrb[0].mxu0
        %1003 = vmatprep.mubr.bf16.mxu0 0
        %1004 = vmatmul.mubr.bf16.gmra.mrb[0].mxu0 %v272
        %v1005 = vpop.f32.mrb[0].mxu0
        %v1006 = vadd.f32 0.0, %v1005
        %v1007 = vpop.f32.mrb[0].mxu0
        %v1008 = vpop.f32.mrb[0].mxu0
        %v1009 = vadd.f32 0.0, %v1008
        %v1010 = vpop.f32.mrb[0].mxu0
        %1011 = vmatprep.mubr.bf16.mxu0 0
        %1012 = vmatmul.mubr.bf16.gmra.mrb[0].mxu0 %v275
        %v1013 = vpop.f32.mrb[0].mxu0
        %v1014 = vadd.f32 0.0, %v1013
        %v1015 = vpop.f32.mrb[0].mxu0
        %v1016 = vpop.f32.mrb[0].mxu0
        %v1017 = vadd.f32 0.0, %v1016
        %v1018 = vpop.f32.mrb[0].mxu0
        %1019 = vmatprep.mubr.bf16.mxu0 0
        %1020 = vmatmul.mubr.bf16.gmra.mrb[0].mxu0 %v278
        %v1021 = vpop.f32.mrb[0].mxu0
        %v1022 = vadd.f32 0.0, %v1021
        %v1023 = vpop.f32.mrb[0].mxu0
        %v1024 = vpop.f32.mrb[0].mxu0
        %v1025 = vadd.f32 0.0, %v1024
        %v1026 = vpop.f32.mrb[0].mxu0
        %1027 = vmatprep.mubr.bf16.mxu0 0
        %1028 = vmatmul.mubr.bf16.gmra.mrb[0].mxu0 %v281
        %v1029 = vpop.f32.mrb[0].mxu0
        %v1030 = vadd.f32 0.0, %v1029
        %v1031 = vpop.f32.mrb[0].mxu0
        %v1032 = vpop.f32.mrb[0].mxu0
        %v1033 = vadd.f32 0.0, %v1032
        %v1034 = vpop.f32.mrb[0].mxu0
        %1035 = vmatprep.mubr.bf16.mxu0 0
        %1036 = vmatmul.mubr.bf16.gmra.mrb[0].mxu0 %v284
        %v1037 = vpop.f32.mrb[0].mxu0
        %v1038 = vadd.f32 0.0, %v1037
        %v1039 = vpop.f32.mrb[0].mxu0
        %v1040 = vpop.f32.mrb[0].mxu0
        %v1041 = vadd.f32 0.0, %v1040
        %v1042 = vpop.f32.mrb[0].mxu0
        %1043 = vmatprep.mubr.bf16.mxu0 0
        %1044 = vmatmul.mubr.bf16.gmra.mrb[0].mxu0 %v287
        %v1045 = vpop.f32.mrb[0].mxu0
        %v1046 = vadd.f32 0.0, %v1045
        %v1047 = vpop.f32.mrb[0].mxu0
        %v1048 = vpop.f32.mrb[0].mxu0
        %v1049 = vadd.f32 0.0, %v1048
        %v1050 = vpop.f32.mrb[0].mxu0
        %1051 = vmatprep.mubr.bf16.mxu0 0
        %1052 = vmatmul.mubr.bf16.gmra.mrb[0].mxu0 %v290
        %v1053 = vpop.f32.mrb[0].mxu0
        %v1054 = vadd.f32 0.0, %v1053
        %v1055 = vpop.f32.mrb[0].mxu0
        %v1056 = vpop.f32.mrb[0].mxu0
        %v1057 = vadd.f32 0.0, %v1056
        %v1058 = vpop.f32.mrb[0].mxu0
        %1059 = vmatprep.mubr.bf16.mxu0 0
        %1060 = vmatmul.mubr.bf16.gmra.mrb[0].mxu0 %v293
        %v1061 = vpop.f32.mrb[0].mxu0
        %v1062 = vadd.f32 0.0, %v1061
        %v1063 = vpop.f32.mrb[0].mxu0
        %v1064 = vpop.f32.mrb[0].mxu0
        %v1065 = vadd.f32 0.0, %v1064
        %v1066 = vpop.f32.mrb[0].mxu0
        %1067 = vmatprep.mubr.bf16.mxu0 0
        %1068 = vmatmul.mubr.bf16.gmra.mrb[0].mxu0 %v296
        %v1069 = vpop.f32.mrb[0].mxu0
        %v1070 = vadd.f32 0.0, %v1069
        %v1071 = vpop.f32.mrb[0].mxu0
        %v1072 = vpop.f32.mrb[0].mxu0
        %v1073 = vadd.f32 0.0, %v1072
        %v1074 = vpop.f32.mrb[0].mxu0
        %1075 = vmatprep.mubr.bf16.mxu0 0
        %1076 = vmatmul.mubr.bf16.gmra.mrb[0].mxu0 %v299
        %v1077 = vpop.f32.mrb[0].mxu0
        %v1078 = vadd.f32 0.0, %v1077
        %v1079 = vpop.f32.mrb[0].mxu0
        %v1080 = vpop.f32.mrb[0].mxu0
        %v1081 = vadd.f32 0.0, %v1080
        %v1082 = vpop.f32.mrb[0].mxu0
        %1083 = vmatprep.mubr.bf16.mxu0 0
        %1084 = vmatmul.mubr.bf16.gmra.mrb[0].mxu0 %v302
        %v1085 = vpop.f32.mrb[0].mxu0
        %v1086 = vadd.f32 0.0, %v1085
        %v1087 = vpop.f32.mrb[0].mxu0
        %v1088 = vpop.f32.mrb[0].mxu0
        %v1089 = vadd.f32 0.0, %v1088
        %v1090 = vpop.f32.mrb[0].mxu0
        %1091 = vmatprep.mubr.bf16.mxu0 0
        %1092 = vmatmul.mubr.bf16.gmra.mrb[0].mxu0 %v305
        %v1093 = vpop.f32.mrb[0].mxu0
        %v1094 = vadd.f32 0.0, %v1093
        %v1095 = vpop.f32.mrb[0].mxu0
        %v1096 = vpop.f32.mrb[0].mxu0
        %v1097 = vadd.f32 0.0, %v1096
        %v1098 = vpop.f32.mrb[0].mxu0
        %1099 = vdwg.mxu0
        %s1100 = scalar_lea.vmem %s194, 768 [#allocation7]
        %1101 = vst [vmem:[%s1100] sm:$0xff] %v974
        %1102 = vst [vmem:[%s1100 + $0x8] sm:$0xff] %v977
        %1103 = vst [vmem:[%s1100 + $0x10] sm:$0xff] %v982
        %1104 = vst [vmem:[%s1100 + $0x18] sm:$0xff] %v985
        %1105 = vst [vmem:[%s1100 + $0x20] sm:$0xff] %v990
        %1106 = vst [vmem:[%s1100 + $0x28] sm:$0xff] %v993
        %1107 = vst [vmem:[%s1100 + $0x30] sm:$0xff] %v998
        %1108 = vst [vmem:[%s1100 + $0x38] sm:$0xff] %v1001
        %1109 = vst [vmem:[%s1100 + $0x40] sm:$0xff] %v1006
        %1110 = vst [vmem:[%s1100 + $0x48] sm:$0xff] %v1009
        %1111 = vst [vmem:[%s1100 + $0x50] sm:$0xff] %v1014
        %1112 = vst [vmem:[%s1100 + $0x58] sm:$0xff] %v1017
        %1113 = vst [vmem:[%s1100 + $0x60] sm:$0xff] %v1022
        %1114 = vst [vmem:[%s1100 + $0x68] sm:$0xff] %v1025
        %1115 = vst [vmem:[%s1100 + $0x70] sm:$0xff] %v1030
        %1116 = vst [vmem:[%s1100 + $0x78] sm:$0xff] %v1033
        %1117 = vst [vmem:[%s1100 + $0x80] sm:$0xff] %v1038
        %1118 = vst [vmem:[%s1100 + $0x88] sm:$0xff] %v1041
        %1119 = vst [vmem:[%s1100 + $0x90] sm:$0xff] %v1046
        %1120 = vst [vmem:[%s1100 + $0x98] sm:$0xff] %v1049
        %1121 = vst [vmem:[%s1100 + $0xa0] sm:$0xff] %v1054
        %1122 = vst [vmem:[%s1100 + $0xa8] sm:$0xff] %v1057
        %1123 = vst [vmem:[%s1100 + $0xb0] sm:$0xff] %v1062
        %1124 = vst [vmem:[%s1100 + $0xb8] sm:$0xff] %v1065
        %1125 = vst [vmem:[%s1100 + $0xc0] sm:$0xff] %v1070
        %1126 = vst [vmem:[%s1100 + $0xc8] sm:$0xff] %v1073
        %1127 = vst [vmem:[%s1100 + $0xd0] sm:$0xff] %v1078
        %1128 = vst [vmem:[%s1100 + $0xd8] sm:$0xff] %v1081
        %1129 = vst [vmem:[%s1100 + $0xe0] sm:$0xff] %v1086
        %1130 = vst [vmem:[%s1100 + $0xe8] sm:$0xff] %v1089
        %1131 = vst [vmem:[%s1100 + $0xf0] sm:$0xff] %v1094
        %1132 = vst [vmem:[%s1100 + $0xf8] sm:$0xff] %v1097
        %s1133 = sand.u32 %s91, 1
        %s1134 = scalar_lea.sflag [#allocation4], %s1133
        %s1135 = sand.u32 %s91, 1
        %s1136 = smul.addr %s1135, 1024
        %s1137 = scalar_lea.vmem [#allocation7], %s1136
        // Predicated region
        $region37: #{tpu_custom_call.1} parent=27 // pred_check
          %p1138 = pneg %p101
        $region38: #{tpu_custom_call.1} parent=27 // pred_check_branch
          %1140 = sbr.rel (%p1138) target = $region40
        $region39: #{tpu_custom_call.1} parent=27 // pred_region
          %s1141 = smul.u32 32, %s25
          %s1143 = ssub.s32 16384, 16384
          %1144 = vsyncadd %s1134, %s1143
          %s1145 = smul.addr %s24, 128
          %s1146 = sadd.s32 %s1141, %s1145
          %s1147 = smul.addr %s1146, 128
          %s1148 = scalar_lea.hbm %s2, %s1147
          %s1149 = sshll.u32 %s1137, 4
          %s1150 = int_to_ptr.vmem [resolvable:$true] %s1149
          %1155 = dma.vmem_to_hbm [thread:$0]  %s1150, 16384, %s1148, %s1134, 128, 128, 8
        $region40: #{tpu_custom_call.1} parent=27 // pred_fallthru
          _
      $region28: #{tpu_custom_call.1} parent=5 // pred_fallthru
        _
      %p1156 = scmp.le.s32.totalorder 2, %s15
      // Predicated region
      $region41: #{tpu_custom_call.1} parent=5 // pred_check
        %p1157 = pneg %p1156
      $region42: #{tpu_custom_call.1} parent=5 // pred_check_branch
        %1159 = sbr.rel (%p1157) target = $region44
      $region43: #{tpu_custom_call.1} parent=5 // pred_region
        %s1160 = ssub.s32 %s15, 2
        // Predicated region
        $region45: #{tpu_custom_call.1} parent=43 // pred_check
          %p1161 = pneg %p107
        $region46: #{tpu_custom_call.1} parent=43 // pred_check_branch
          %1163 = sbr.rel (%p1161) target = $region48
        $region47: #{tpu_custom_call.1} parent=43 // pred_region
          %s1164 = sand.u32 %s92, 1
          %s1165 = scalar_lea.sflag [#allocation4], %s1164
          %s1166 = sand.u32 %s92, 1
          %s1167 = smul.addr %s1166, 1024
          %s1168 = scalar_lea.vmem [#allocation7], %s1167
          %1169 = dma.done %s1165, 16384
        $region48: #{tpu_custom_call.1} parent=43 // pred_fallthru
          _
      $region44: #{tpu_custom_call.1} parent=5 // pred_fallthru
        _
    $region6: #{tpu_custom_call.1} parent=1 // loop_footer
      %s19 = sadd.s32 1, %s15
    $region7: #{tpu_custom_call.1} parent=1 // loop_footer_branch
      %14 = sbr.rel target = $region3
    $region8: #{tpu_custom_call.1} parent=1 // loop_exit
      _
    %1170 = vsyncpa [#allocation3], 1
    %s1171 = scalar_lea.sflag [#allocation3], 1
    %1172 = vsyncpa %s1171, 1
    %1173 = vsyncpa [#allocation6], 1
    %1174 = vsyncpa [#allocation4], 1
    %s1175 = scalar_lea.sflag [#allocation4], 1
    %1176 = vsyncpa %s1175, 1

// kernel: tpu_custom_call.1
$region0: #{tpu_custom_call.1}
  #allocation0 [shape = 'u32[]', space=smem, size = 0x4, offset = 0x4, fixed_abs, tag = 'smem constant byte address 0x4 - core index']
  #allocation1 [shape = 'u32[144,128]{1,0:T(1,128)}', space=vmem, size = 0x12000, scoped, tag = 'internal scratch']
  %s0 = inlined_call_operand.hbm [shape: f32[2,32,256], index: 0, kind: input, shape index: {}]
  %s1 = inlined_call_operand.hbm [shape: bf16[4,32,128], index: 1, kind: input, shape index: {}]
  %s2 = inlined_call_operand.hbm [shape: f32[2,4,256,128], index: 2, kind: output, shape index: {}]
  %s3 = sld [smem:[#allocation0]]
  $region49: #{tpu_custom_call.1} parent=0
    _
  %s5 = ssub.s32 1, %s3
  %s6 = scalar_select 0, %s5, %s3
  $region1: #{tpu_custom_call.1} parent=0
    #allocation2 [shape = 'u8[65536]{0}', space=vmem, size = 0x10000, scoped, tag = 'input window, operand 0']
    #allocation3 [shape = 's32[2]{0}', space=sflag, size = 0x8, scoped, tag = 'scoped memory for tpu_custom_call.1']
    #allocation4 [shape = 's32[2]{0}', space=sflag, size = 0x8, scoped, tag = 'scoped memory for tpu_custom_call.1']
    #allocation5 [shape = 'u8[32768]{0}', space=vmem, size = 0x8000, scoped, tag = 'input window, operand 1, single buffered']
    #allocation6 [shape = 's32[1]{0}', space=sflag, size = 0x4, scoped, tag = 'scoped memory for tpu_custom_call.1']
    #allocation7 [shape = 'u8[1048576]{0}', space=vmem, size = 0x100000, scoped, tag = 'output window, operand 0']
    %7 = vsyncpa [#allocation3], 0
    %s8 = scalar_lea.sflag [#allocation3], 1
    %9 = vsyncpa %s8, 0
    %10 = vsyncpa [#allocation6], 0
    %11 = vsyncpa [#allocation4], 0
    %s12 = scalar_lea.sflag [#allocation4], 1
    %13 = vsyncpa %s12, 0
    loop: start=0, step=1, limit=4
    $region2: #{tpu_custom_call.1} parent=1 // loop_pre_header
      _
    $region3: #{tpu_custom_call.1} parent=1 // loop_header
      %s15 = sphi 0, %s19
      %p16 = scmp.ge.s32.totalorder %s15, 4
      %s22 = sphi 0, %s34
      %s23 = sphi 0, %s30
      %s24 = sphi 0, %s22
      %s25 = sphi 0, %s23
      %s26 = sphi 0, %s24
      %s27 = sphi 0, %s25
      %s39 = sphi 0, %s41
      %s42 = sphi 0, %s39
      %s43 = sphi 0, %s42
      %s59 = sphi 0, %s43
      %s63 = sphi 0, %s63
      %s65 = sphi 0, %s63
      %s66 = sphi 0, %s65
      %s80 = sphi 0, %s66
      %s88 = sphi 0, %s90
      %s91 = sphi 0, %s88
      %s92 = sphi 0, %s91
      %s108 = sphi 0, %s92
    $region4: #{tpu_custom_call.1} parent=1 // loop_header_branch
      %18 = sbr.rel (%p16) target = $region8
    $region5: #{tpu_custom_call.1} parent=1 // loop_body
      %s20 = ssub.s32 %s15, 1
      %s21 = ssub.s32 %s15, 2
      %s28 = sadd.s32 1, %s23
      %p29 = scmp.ge.s32.totalorder %s28, 1
      %s30 = scalar_select %p29, 0, %s28
      %s31 = sadd.s32 1, %s22
      %s32 = scalar_select %p29, %s31, %s22
      %p33 = scmp.ge.s32.totalorder %s32, 2
      %s34 = scalar_select %p33, 0, %s32
      %s35 = ssub.s32 %s22, %s34
      %s36 = ssub.s32 %s23, %s30
      %s37 = sor.u32 %s35, %s36
      %p38 = scmp.eq.s32.totalorder %s37, 0
      %s40 = sadd.s32 %s39, 1
      %s41 = scalar_select %p38, %s39, %s40
      %p44 = pneg %p38
      %p45 = scmp.eq.s32.totalorder %s15, 1
      %p46 = por %p44, %p45
      %p47 = scmp.ne.s32.totalorder %s39, %s42
      %p48 = scmp.eq.s32.totalorder %s15, 0
      %p49 = por %p47, %p48
      %p50 = scmp.ne.s32.totalorder %s39, %s42
      %p51 = scmp.eq.s32.totalorder %s20, 1
      %p52 = por %p50, %p51
      %p53 = scmp.ne.s32.totalorder %s42, %s43
      %p54 = scmp.eq.s32.totalorder %s20, 0
      %p55 = por %p53, %p54
      %p56 = scmp.ne.s32.totalorder %s42, %s43
      %p57 = scmp.eq.s32.totalorder %s21, 1
      %p58 = por %p56, %p57
      %p60 = scmp.ne.s32.totalorder %s43, %s59
      %p61 = scmp.eq.s32.totalorder %s21, 0
      %p62 = por %p60, %p61
      %s64 = sadd.s32 %s63, 1
      %p67 = scmp.eq.s32.totalorder %s15, 1
      %p68 = scmp.ne.s32.totalorder %s63, %s65
      %p69 = scmp.eq.s32.totalorder %s15, 0
      %p70 = por %p68, %p69
      %p71 = scmp.ne.s32.totalorder %s63, %s65
      %p72 = scmp.eq.s32.totalorder %s20, 1
      %p73 = por %p71, %p72
      %p74 = scmp.ne.s32.totalorder %s65, %s66
      %p75 = scmp.eq.s32.totalorder %s20, 0
      %p76 = por %p74, %p75
      %p77 = scmp.ne.s32.totalorder %s65, %s66
      %p78 = scmp.eq.s32.totalorder %s21, 1
      %p79 = por %p77, %p78
      %p81 = scmp.ne.s32.totalorder %s66, %s80
      %p82 = scmp.eq.s32.totalorder %s21, 0
      %p83 = por %p81, %p82
      %s84 = ssub.s32 %s22, %s34
      %s85 = ssub.s32 %s23, %s30
      %s86 = sor.u32 %s84, %s85
      %p87 = scmp.eq.s32.totalorder %s86, 0
      %s89 = sadd.s32 %s88, 1
      %s90 = scalar_select %p87, %s88, %s89
      %p93 = pneg %p87
      %p94 = scmp.eq.s32.totalorder %s15, 1
      %p95 = por %p93, %p94
      %p96 = scmp.ne.s32.totalorder %s88, %s91
      %p97 = scmp.eq.s32.totalorder %s15, 0
      %p98 = por %p96, %p97
      %p99 = scmp.ne.s32.totalorder %s88, %s91
      %p100 = scmp.eq.s32.totalorder %s20, 1
      %p101 = por %p99, %p100
      %p102 = scmp.ne.s32.totalorder %s91, %s92
      %p103 = scmp.eq.s32.totalorder %s20, 0
      %p104 = por %p102, %p103
      %p105 = scmp.ne.s32.totalorder %s91, %s92
      %p106 = scmp.eq.s32.totalorder %s21, 1
      %p107 = por %p105, %p106
      %p109 = scmp.ne.s32.totalorder %s92, %s108
      %p110 = scmp.eq.s32.totalorder %s21, 0
      %p111 = por %p109, %p110
      %p112 = scmp.le.s32.totalorder 1, %s15
      %p113 = scmp.lt.s32.totalorder %s15, 3
      %p114 = pnand %p112, %p113
      %p115 = pneg %p114
      // Predicated region
      $region9: #{tpu_custom_call.1} parent=5 // pred_check
        _
      $region10: #{tpu_custom_call.1} parent=5 // pred_check_branch
        %117 = sbr.rel (%p114) target = $region12
      $region11: #{tpu_custom_call.1} parent=5 // pred_region
        %s118 = ssub.s32 %s15, 1
        // Predicated region
        $region13: #{tpu_custom_call.1} parent=11 // pred_check
          %p119 = pneg %p76
        $region14: #{tpu_custom_call.1} parent=11 // pred_check_branch
          %121 = sbr.rel (%p119) target = $region16
        $region15: #{tpu_custom_call.1} parent=11 // pred_region
          %s123 = ssub.s32 1024, 1024
          %124 = vsyncadd [#allocation6], %s123
          %s125 = sshll.u32 [#allocation5], 4
          %s126 = int_to_ptr.vmem [resolvable:$true] %s125
          %131 = dma.hbm_to_vmem [thread:$0]  %s1, 1024, %s126, [#allocation6], 64, 64, 4
        $region16: #{tpu_custom_call.1} parent=11 // pred_fallthru
          _
      $region12: #{tpu_custom_call.1} parent=5 // pred_fallthru
        _
      %p132 = scmp.lt.s32.totalorder %s15, 2
      // Predicated region
      $region17: #{tpu_custom_call.1} parent=5 // pred_check
        %p133 = pneg %p132
      $region18: #{tpu_custom_call.1} parent=5 // pred_check_branch
        %135 = sbr.rel (%p133) target = $region20
      $region19: #{tpu_custom_call.1} parent=5 // pred_region
        // Predicated region
        $region21: #{tpu_custom_call.1} parent=19 // pred_check
          %p136 = pneg %p49
        $region22: #{tpu_custom_call.1} parent=19 // pred_check_branch
          %138 = sbr.rel (%p136) target = $region24
        $region23: #{tpu_custom_call.1} parent=19 // pred_region
          %s139 = sand.u32 %s39, 1
          %s140 = scalar_lea.sflag [#allocation3], %s139
          %s141 = sand.u32 %s39, 1
          %s142 = smul.addr %s141, 64
          %s143 = scalar_lea.vmem [#allocation2], %s142
          %s144 = smul.u32 2, %s23
          %s146 = ssub.s32 1024, 1024
          %147 = vsyncadd %s140, %s146
          %s148 = smul.addr %s22, 8
          %s149 = sadd.s32 %s144, %s148
          %s150 = smul.addr %s149, 128
          %s151 = scalar_lea.hbm %s0, %s150
          %s152 = sshll.u32 %s143, 4
          %s153 = int_to_ptr.vmem [resolvable:$true] %s152
          %158 = dma.hbm_to_vmem [thread:$0]  %s151, 1024, %s153, %s140, 256, 256, 16
        $region24: #{tpu_custom_call.1} parent=19 // pred_fallthru
          _
      $region20: #{tpu_custom_call.1} parent=5 // pred_fallthru
        _
      %p159 = scmp.le.s32.totalorder 1, %s15
      %p160 = scmp.lt.s32.totalorder %s15, 3
      %p161 = pnand %p159, %p160
      %p162 = pneg %p161
      // Predicated region
      $region25: #{tpu_custom_call.1} parent=5 // pred_check
        _
      $region26: #{tpu_custom_call.1} parent=5 // pred_check_branch
        %164 = sbr.rel (%p161) target = $region28
      $region27: #{tpu_custom_call.1} parent=5 // pred_region
        %s165 = ssub.s32 %s15, 1
        %s166 = sand.u32 %s42, 1
        %s167 = scalar_lea.sflag [#allocation3], %s166
        %s168 = sand.u32 %s42, 1
        %s169 = smul.addr %s168, 64
        %s170 = scalar_lea.vmem [#allocation2], %s169
        // Predicated region
        $region29: #{tpu_custom_call.1} parent=27 // pred_check
          %p171 = pneg %p55
        $region30: #{tpu_custom_call.1} parent=27 // pred_check_branch
          %173 = sbr.rel (%p171) target = $region32
        $region31: #{tpu_custom_call.1} parent=27 // pred_region
          %174 = dma.done %s167, 1024
        $region32: #{tpu_custom_call.1} parent=27 // pred_fallthru
          _
        // Predicated region
        $region33: #{tpu_custom_call.1} parent=27 // pred_check
          %p175 = pneg %p76
        $region34: #{tpu_custom_call.1} parent=27 // pred_check_branch
          %177 = sbr.rel (%p175) target = $region36
        $region35: #{tpu_custom_call.1} parent=27 // pred_region
          %178 = dma.done [#allocation6], 1024
        $region36: #{tpu_custom_call.1} parent=27 // pred_fallthru
          _
        %s179 = sand.u32 %s42, 1
        %s180 = scalar_lea.sflag [#allocation3], %s179
        %s181 = sand.u32 %s42, 1
        %s182 = smul.addr %s181, 64
        %s183 = scalar_lea.vmem [#allocation2], %s182
        %p184 = pneg %p55
        %p185 = pneg %p52
        %p186 = pneg %p76
        %p187 = pneg %p73
        %p188 = pneg %p104
        %p189 = pneg %p101
        %s190 = sand.u32 %s91, 1
        %s191 = scalar_lea.sflag [#allocation4], %s190
        %s192 = sand.u32 %s91, 1
        %s193 = smul.addr %s192, 1024
        %s194 = scalar_lea.vmem [#allocation7], %s193
        %s195 = smul.u32 2, %s25
        %s196 = smul.u32 32, %s25
        %v198 = vld [vmem:[%s170] sm:$0xff]
        %v199 = vld [vmem:[%s170 + $0x8] sm:$0xff]
        %v200 = vld [vmem:[%s170 + $0x10] sm:$0xff]
        %v201 = vld [vmem:[%s170 + $0x18] sm:$0xff]
        %v202 = vld [vmem:[%s170 + $0x20] sm:$0xff]
        %v203 = vld [vmem:[%s170 + $0x28] sm:$0xff]
        %v204 = vld [vmem:[%s170 + $0x30] sm:$0xff]
        %v205 = vld [vmem:[%s170 + $0x38] sm:$0xff]
        %v206 = vpack.c.bf16 %v200, %v198
        %v207 = vpack.c.bf16 %v201, %v199
        %v208 = vpack.c.bf16 %v204, %v202
        %v209 = vpack.c.bf16 %v205, %v203
        %v210 = vld [vmem:[#allocation5] sm:$0xf]
        %v211 = vld [vmem:[#allocation5 + $0x4] sm:$0xf]
        %v212 = vld [vmem:[#allocation5 + $0x8] sm:$0xf]
        %v213 = vld [vmem:[#allocation5 + $0xc] sm:$0xf]
        %214 = vxpose.xlu0.c.b16.start [1/8] %v206, 128
        %215 = vxpose.xlu0.c.b16.cont [2/8] %v208, 128
        %216 = vxpose.xlu0.c.b16.cont [3/8] 0, 128
        %217 = vxpose.xlu0.c.b16.cont [4/8] 0, 128
        %218 = vxpose.xlu0.c.b16.cont [5/8] 0, 128
        %219 = vxpose.xlu0.c.b16.cont [6/8] 0, 128
        %220 = vxpose.xlu0.c.b16.cont [7/8] 0, 128
        %221 = vxpose.xlu0.c.b16.end [8/8] 0, 128
        %v222 = vpop.trf.xlu0
        %v223 = vpop.trf.xlu0
        %v224 = vpop.trf.xlu0
        %v225 = vpop.trf.xlu0
        %v226 = vpop.trf.xlu0
        %v227 = vpop.trf.xlu0
        %v228 = vpop.trf.xlu0
        %v229 = vpop.trf.xlu0
        %230 = vxpose.xlu0.c.b16.start [1/8] %v207, 128
        %231 = vxpose.xlu0.c.b16.cont [2/8] %v209, 128
        %232 = vxpose.xlu0.c.b16.cont [3/8] 0, 128
        %233 = vxpose.xlu0.c.b16.cont [4/8] 0, 128
        %234 = vxpose.xlu0.c.b16.cont [5/8] 0, 128
        %235 = vxpose.xlu0.c.b16.cont [6/8] 0, 128
        %236 = vxpose.xlu0.c.b16.cont [7/8] 0, 128
        %237 = vxpose.xlu0.c.b16.end [8/8] 0, 128
        %v238 = vpop.trf.xlu0
        %v239 = vpop.trf.xlu0
        %v240 = vpop.trf.xlu0
        %v241 = vpop.trf.xlu0
        %v242 = vpop.trf.xlu0
        %v243 = vpop.trf.xlu0
        %v244 = vpop.trf.xlu0
        %v245 = vpop.trf.xlu0
        %v250 = vunpack.c.l.b16 %v210
        %v251 = vunpack.c.l.b16 %v211
        %v252 = vunpack.c.l.b16 %v212
        %v253 = vunpack.c.l.b16 %v213
        %v254 = vpack.c.b16 %v251, %v250
        %v255 = vpack.c.b16 %v253, %v252
        %vm258 = vcmask 261120
        %v260 = vsel %vm258, %v222, 0
        %v263 = vsel %vm258, %v223, 0
        %v266 = vsel %vm258, %v224, 0
        %v269 = vsel %vm258, %v225, 0
        %v272 = vsel %vm258, %v226, 0
        %v275 = vsel %vm258, %v227, 0
        %v278 = vsel %vm258, %v228, 0
        %v281 = vsel %vm258, %v229, 0
        %v284 = vsel %vm258, %v238, 0
        %v287 = vsel %vm258, %v239, 0
        %v290 = vsel %vm258, %v240, 0
        %v293 = vsel %vm258, %v241, 0
        %v296 = vsel %vm258, %v242, 0
        %v299 = vsel %vm258, %v243, 0
        %v302 = vsel %vm258, %v244, 0
        %v305 = vsel %vm258, %v245, 0
        %307 = vmatprep.subr.bf16.mxu0 0
        %308 = vmatpush1.bf16.msra.mxu0 %v254
        %309 = vmatprep.subr.bf16.mxu0 0
        %310 = vmatpush1.bf16.msra.mxu0 %v255
        %311 = vmatprep.subr.bf16.mxu0 0
        %312 = vmatpush1.bf16.msra.mxu0 0
        %313 = vmatprep.subr.bf16.mxu0 0
        %314 = vmatpush1.bf16.msra.mxu0 0
        %315 = vmatprep.subr.bf16.mxu0 0
        %316 = vmatpush1.bf16.msra.mxu0 0
        %317 = vmatprep.subr.bf16.mxu0 0
        %318 = vmatpush1.bf16.msra.mxu0 0
        %319 = vmatprep.subr.bf16.mxu0 0
        %320 = vmatpush1.bf16.msra.mxu0 0
        %321 = vmatprep.subr.bf16.mxu0 0
        %322 = vmatpush1.bf16.msra.mxu0 0
        %323 = vmatprep.subr.bf16.mxu0 0
        %324 = vmatpush1.bf16.msra.mxu0 0
        %325 = vmatprep.subr.bf16.mxu0 0
        %326 = vmatpush1.bf16.msra.mxu0 0
        %327 = vmatprep.subr.bf16.mxu0 0
        %328 = vmatpush1.bf16.msra.mxu0 0
        %329 = vmatprep.subr.bf16.mxu0 0
        %330 = vmatpush1.bf16.msra.mxu0 0
        %331 = vmatprep.subr.bf16.mxu0 0
        %332 = vmatpush1.bf16.msra.mxu0 0
        %333 = vmatprep.subr.bf16.mxu0 0
        %334 = vmatpush1.bf16.msra.mxu0 0
        %335 = vmatprep.subr.bf16.mxu0 0
        %336 = vmatpush1.bf16.msra.mxu0 0
        %337 = vmatprep.subr.bf16.mxu0 0
        %338 = vmatpush1.bf16.msra.mxu0 0
        %339 = vmatprep.mubr.bf16.mxu0 0
        %340 = vmatmul.mubr.bf16.gmra.mrb[0].mxu0 %v260
        %v341 = vpop.f32.mrb[0].mxu0
        %v342 = vadd.f32 0.0, %v341
        %v343 = vpop.f32.mrb[0].mxu0
        %v344 = vpop.f32.mrb[0].mxu0
        %v345 = vadd.f32 0.0, %v344
        %v346 = vpop.f32.mrb[0].mxu0
        %347 = vmatprep.mubr.bf16.mxu0 0
        %348 = vmatmul.mubr.bf16.gmra.mrb[0].mxu0 %v263
        %v349 = vpop.f32.mrb[0].mxu0
        %v350 = vadd.f32 0.0, %v349
        %v351 = vpop.f32.mrb[0].mxu0
        %v352 = vpop.f32.mrb[0].mxu0
        %v353 = vadd.f32 0.0, %v352
        %v354 = vpop.f32.mrb[0].mxu0
        %355 = vmatprep.mubr.bf16.mxu0 0
        %356 = vmatmul.mubr.bf16.gmra.mrb[0].mxu0 %v266
        %v357 = vpop.f32.mrb[0].mxu0
        %v358 = vadd.f32 0.0, %v357
        %v359 = vpop.f32.mrb[0].mxu0
        %v360 = vpop.f32.mrb[0].mxu0
        %v361 = vadd.f32 0.0, %v360
        %v362 = vpop.f32.mrb[0].mxu0
        %363 = vmatprep.mubr.bf16.mxu0 0
        %364 = vmatmul.mubr.bf16.gmra.mrb[0].mxu0 %v269
        %v365 = vpop.f32.mrb[0].mxu0
        %v366 = vadd.f32 0.0, %v365
        %v367 = vpop.f32.mrb[0].mxu0
        %v368 = vpop.f32.mrb[0].mxu0
        %v369 = vadd.f32 0.0, %v368
        %v370 = vpop.f32.mrb[0].mxu0
        %371 = vmatprep.mubr.bf16.mxu0 0
        %372 = vmatmul.mubr.bf16.gmra.mrb[0].mxu0 %v272
        %v373 = vpop.f32.mrb[0].mxu0
        %v374 = vadd.f32 0.0, %v373
        %v375 = vpop.f32.mrb[0].mxu0
        %v376 = vpop.f32.mrb[0].mxu0
        %v377 = vadd.f32 0.0, %v376
        %v378 = vpop.f32.mrb[0].mxu0
        %379 = vmatprep.mubr.bf16.mxu0 0
        %380 = vmatmul.mubr.bf16.gmra.mrb[0].mxu0 %v275
        %v381 = vpop.f32.mrb[0].mxu0
        %v382 = vadd.f32 0.0, %v381
        %v383 = vpop.f32.mrb[0].mxu0
        %v384 = vpop.f32.mrb[0].mxu0
        %v385 = vadd.f32 0.0, %v384
        %v386 = vpop.f32.mrb[0].mxu0
        %387 = vmatprep.mubr.bf16.mxu0 0
        %388 = vmatmul.mubr.bf16.gmra.mrb[0].mxu0 %v278
        %v389 = vpop.f32.mrb[0].mxu0
        %v390 = vadd.f32 0.0, %v389
        %v391 = vpop.f32.mrb[0].mxu0
        %v392 = vpop.f32.mrb[0].mxu0
        %v393 = vadd.f32 0.0, %v392
        %v394 = vpop.f32.mrb[0].mxu0
        %395 = vmatprep.mubr.bf16.mxu0 0
        %396 = vmatmul.mubr.bf16.gmra.mrb[0].mxu0 %v281
        %v397 = vpop.f32.mrb[0].mxu0
        %v398 = vadd.f32 0.0, %v397
        %v399 = vpop.f32.mrb[0].mxu0
        %v400 = vpop.f32.mrb[0].mxu0
        %v401 = vadd.f32 0.0, %v400
        %v402 = vpop.f32.mrb[0].mxu0
        %403 = vmatprep.mubr.bf16.mxu0 0
        %404 = vmatmul.mubr.bf16.gmra.mrb[0].mxu0 %v284
        %v405 = vpop.f32.mrb[0].mxu0
        %v406 = vadd.f32 0.0, %v405
        %v407 = vpop.f32.mrb[0].mxu0
        %v408 = vpop.f32.mrb[0].mxu0
        %v409 = vadd.f32 0.0, %v408
        %v410 = vpop.f32.mrb[0].mxu0
        %411 = vmatprep.mubr.bf16.mxu0 0
        %412 = vmatmul.mubr.bf16.gmra.mrb[0].mxu0 %v287
        %v413 = vpop.f32.mrb[0].mxu0
        %v414 = vadd.f32 0.0, %v413
        %v415 = vpop.f32.mrb[0].mxu0
        %v416 = vpop.f32.mrb[0].mxu0
        %v417 = vadd.f32 0.0, %v416
        %v418 = vpop.f32.mrb[0].mxu0
        %419 = vmatprep.mubr.bf16.mxu0 0
        %420 = vmatmul.mubr.bf16.gmra.mrb[0].mxu0 %v290
        %v421 = vpop.f32.mrb[0].mxu0
        %v422 = vadd.f32 0.0, %v421
        %v423 = vpop.f32.mrb[0].mxu0
        %v424 = vpop.f32.mrb[0].mxu0
        %v425 = vadd.f32 0.0, %v424
        %v426 = vpop.f32.mrb[0].mxu0
        %427 = vmatprep.mubr.bf16.mxu0 0
        %428 = vmatmul.mubr.bf16.gmra.mrb[0].mxu0 %v293
        %v429 = vpop.f32.mrb[0].mxu0
        %v430 = vadd.f32 0.0, %v429
        %v431 = vpop.f32.mrb[0].mxu0
        %v432 = vpop.f32.mrb[0].mxu0
        %v433 = vadd.f32 0.0, %v432
        %v434 = vpop.f32.mrb[0].mxu0
        %435 = vmatprep.mubr.bf16.mxu0 0
        %436 = vmatmul.mubr.bf16.gmra.mrb[0].mxu0 %v296
        %v437 = vpop.f32.mrb[0].mxu0
        %v438 = vadd.f32 0.0, %v437
        %v439 = vpop.f32.mrb[0].mxu0
        %v440 = vpop.f32.mrb[0].mxu0
        %v441 = vadd.f32 0.0, %v440
        %v442 = vpop.f32.mrb[0].mxu0
        %443 = vmatprep.mubr.bf16.mxu0 0
        %444 = vmatmul.mubr.bf16.gmra.mrb[0].mxu0 %v299
        %v445 = vpop.f32.mrb[0].mxu0
        %v446 = vadd.f32 0.0, %v445
        %v447 = vpop.f32.mrb[0].mxu0
        %v448 = vpop.f32.mrb[0].mxu0
        %v449 = vadd.f32 0.0, %v448
        %v450 = vpop.f32.mrb[0].mxu0
        %451 = vmatprep.mubr.bf16.mxu0 0
        %452 = vmatmul.mubr.bf16.gmra.mrb[0].mxu0 %v302
        %v453 = vpop.f32.mrb[0].mxu0
        %v454 = vadd.f32 0.0, %v453
        %v455 = vpop.f32.mrb[0].mxu0
        %v456 = vpop.f32.mrb[0].mxu0
        %v457 = vadd.f32 0.0, %v456
        %v458 = vpop.f32.mrb[0].mxu0
        %459 = vmatprep.mubr.bf16.mxu0 0
        %460 = vmatmul.mubr.bf16.gmra.mrb[0].mxu0 %v305
        %v461 = vpop.f32.mrb[0].mxu0
        %v462 = vadd.f32 0.0, %v461
        %v463 = vpop.f32.mrb[0].mxu0
        %v464 = vpop.f32.mrb[0].mxu0
        %v465 = vadd.f32 0.0, %v464
        %v466 = vpop.f32.mrb[0].mxu0
        %467 = vdwg.mxu0
        %468 = vst [vmem:[%s194] sm:$0xff] %v342
        %469 = vst [vmem:[%s194 + $0x8] sm:$0xff] %v345
        %470 = vst [vmem:[%s194 + $0x10] sm:$0xff] %v350
        %471 = vst [vmem:[%s194 + $0x18] sm:$0xff] %v353
        %472 = vst [vmem:[%s194 + $0x20] sm:$0xff] %v358
        %473 = vst [vmem:[%s194 + $0x28] sm:$0xff] %v361
        %474 = vst [vmem:[%s194 + $0x30] sm:$0xff] %v366
        %475 = vst [vmem:[%s194 + $0x38] sm:$0xff] %v369
        %476 = vst [vmem:[%s194 + $0x40] sm:$0xff] %v374
        %477 = vst [vmem:[%s194 + $0x48] sm:$0xff] %v377
        %478 = vst [vmem:[%s194 + $0x50] sm:$0xff] %v382
        %479 = vst [vmem:[%s194 + $0x58] sm:$0xff] %v385
        %480 = vst [vmem:[%s194 + $0x60] sm:$0xff] %v390
        %481 = vst [vmem:[%s194 + $0x68] sm:$0xff] %v393
        %482 = vst [vmem:[%s194 + $0x70] sm:$0xff] %v398
        %483 = vst [vmem:[%s194 + $0x78] sm:$0xff] %v401
        %484 = vst [vmem:[%s194 + $0x80] sm:$0xff] %v406
        %485 = vst [vmem:[%s194 + $0x88] sm:$0xff] %v409
        %486 = vst [vmem:[%s194 + $0x90] sm:$0xff] %v414
        %487 = vst [vmem:[%s194 + $0x98] sm:$0xff] %v417
        %488 = vst [vmem:[%s194 + $0xa0] sm:$0xff] %v422
        %489 = vst [vmem:[%s194 + $0xa8] sm:$0xff] %v425
        %490 = vst [vmem:[%s194 + $0xb0] sm:$0xff] %v430
        %491 = vst [vmem:[%s194 + $0xb8] sm:$0xff] %v433
        %492 = vst [vmem:[%s194 + $0xc0] sm:$0xff] %v438
        %493 = vst [vmem:[%s194 + $0xc8] sm:$0xff] %v441
        %494 = vst [vmem:[%s194 + $0xd0] sm:$0xff] %v446
        %495 = vst [vmem:[%s194 + $0xd8] sm:$0xff] %v449
        %496 = vst [vmem:[%s194 + $0xe0] sm:$0xff] %v454
        %497 = vst [vmem:[%s194 + $0xe8] sm:$0xff] %v457
        %498 = vst [vmem:[%s194 + $0xf0] sm:$0xff] %v462
        %499 = vst [vmem:[%s194 + $0xf8] sm:$0xff] %v465
        %s500 = scalar_lea.vmem [#allocation5], 16
        %v501 = vld [vmem:[%s500] sm:$0xf]
        %v502 = vld [vmem:[%s500 + $0x4] sm:$0xf]
        %v503 = vld [vmem:[%s500 + $0x8] sm:$0xf]
        %v504 = vld [vmem:[%s500 + $0xc] sm:$0xf]
        %v509 = vunpack.c.l.b16 %v501
        %v510 = vunpack.c.l.b16 %v502
        %v511 = vunpack.c.l.b16 %v503
        %v512 = vunpack.c.l.b16 %v504
        %v513 = vpack.c.b16 %v510, %v509
        %v514 = vpack.c.b16 %v512, %v511
        %517 = vmatprep.subr.bf16.mxu0 0
        %518 = vmatpush1.bf16.msra.mxu0 %v513
        %519 = vmatprep.subr.bf16.mxu0 0
        %520 = vmatpush1.bf16.msra.mxu0 %v514
        %521 = vmatprep.subr.bf16.mxu0 0
        %522 = vmatpush1.bf16.msra.mxu0 0
        %523 = vmatprep.subr.bf16.mxu0 0
        %524 = vmatpush1.bf16.msra.mxu0 0
        %525 = vmatprep.subr.bf16.mxu0 0
        %526 = vmatpush1.bf16.msra.mxu0 0
        %527 = vmatprep.subr.bf16.mxu0 0
        %528 = vmatpush1.bf16.msra.mxu0 0
        %529 = vmatprep.subr.bf16.mxu0 0
        %530 = vmatpush1.bf16.msra.mxu0 0
        %531 = vmatprep.subr.bf16.mxu0 0
        %532 = vmatpush1.bf16.msra.mxu0 0
        %533 = vmatprep.subr.bf16.mxu0 0
        %534 = vmatpush1.bf16.msra.mxu0 0
        %535 = vmatprep.subr.bf16.mxu0 0
        %536 = vmatpush1.bf16.msra.mxu0 0
        %537 = vmatprep.subr.bf16.mxu0 0
        %538 = vmatpush1.bf16.msra.mxu0 0
        %539 = vmatprep.subr.bf16.mxu0 0
        %540 = vmatpush1.bf16.msra.mxu0 0
        %541 = vmatprep.subr.bf16.mxu0 0
        %542 = vmatpush1.bf16.msra.mxu0 0
        %543 = vmatprep.subr.bf16.mxu0 0
        %544 = vmatpush1.bf16.msra.mxu0 0
        %545 = vmatprep.subr.bf16.mxu0 0
        %546 = vmatpush1.bf16.msra.mxu0 0
        %547 = vmatprep.subr.bf16.mxu0 0
        %548 = vmatpush1.bf16.msra.mxu0 0
        %549 = vmatprep.mubr.bf16.mxu0 0
        %550 = vmatmul.mubr.bf16.gmra.mrb[0].mxu0 %v260
        %v551 = vpop.f32.mrb[0].mxu0
        %v552 = vadd.f32 0.0, %v551
        %v553 = vpop.f32.mrb[0].mxu0
        %v554 = vpop.f32.mrb[0].mxu0
        %v555 = vadd.f32 0.0, %v554
        %v556 = vpop.f32.mrb[0].mxu0
        %557 = vmatprep.mubr.bf16.mxu0 0
        %558 = vmatmul.mubr.bf16.gmra.mrb[0].mxu0 %v263
        %v559 = vpop.f32.mrb[0].mxu0
        %v560 = vadd.f32 0.0, %v559
        %v561 = vpop.f32.mrb[0].mxu0
        %v562 = vpop.f32.mrb[0].mxu0
        %v563 = vadd.f32 0.0, %v562
        %v564 = vpop.f32.mrb[0].mxu0
        %565 = vmatprep.mubr.bf16.mxu0 0
        %566 = vmatmul.mubr.bf16.gmra.mrb[0].mxu0 %v266
        %v567 = vpop.f32.mrb[0].mxu0
        %v568 = vadd.f32 0.0, %v567
        %v569 = vpop.f32.mrb[0].mxu0
        %v570 = vpop.f32.mrb[0].mxu0
        %v571 = vadd.f32 0.0, %v570
        %v572 = vpop.f32.mrb[0].mxu0
        %573 = vmatprep.mubr.bf16.mxu0 0
        %574 = vmatmul.mubr.bf16.gmra.mrb[0].mxu0 %v269
        %v575 = vpop.f32.mrb[0].mxu0
        %v576 = vadd.f32 0.0, %v575
        %v577 = vpop.f32.mrb[0].mxu0
        %v578 = vpop.f32.mrb[0].mxu0
        %v579 = vadd.f32 0.0, %v578
        %v580 = vpop.f32.mrb[0].mxu0
        %581 = vmatprep.mubr.bf16.mxu0 0
        %582 = vmatmul.mubr.bf16.gmra.mrb[0].mxu0 %v272
        %v583 = vpop.f32.mrb[0].mxu0
        %v584 = vadd.f32 0.0, %v583
        %v585 = vpop.f32.mrb[0].mxu0
        %v586 = vpop.f32.mrb[0].mxu0
        %v587 = vadd.f32 0.0, %v586
        %v588 = vpop.f32.mrb[0].mxu0
        %589 = vmatprep.mubr.bf16.mxu0 0
        %590 = vmatmul.mubr.bf16.gmra.mrb[0].mxu0 %v275
        %v591 = vpop.f32.mrb[0].mxu0
        %v592 = vadd.f32 0.0, %v591
        %v593 = vpop.f32.mrb[0].mxu0
        %v594 = vpop.f32.mrb[0].mxu0
        %v595 = vadd.f32 0.0, %v594
        %v596 = vpop.f32.mrb[0].mxu0
        %597 = vmatprep.mubr.bf16.mxu0 0
        %598 = vmatmul.mubr.bf16.gmra.mrb[0].mxu0 %v278
        %v599 = vpop.f32.mrb[0].mxu0
        %v600 = vadd.f32 0.0, %v599
        %v601 = vpop.f32.mrb[0].mxu0
        %v602 = vpop.f32.mrb[0].mxu0
        %v603 = vadd.f32 0.0, %v602
        %v604 = vpop.f32.mrb[0].mxu0
        %605 = vmatprep.mubr.bf16.mxu0 0
        %606 = vmatmul.mubr.bf16.gmra.mrb[0].mxu0 %v281
        %v607 = vpop.f32.mrb[0].mxu0
        %v608 = vadd.f32 0.0, %v607
        %v609 = vpop.f32.mrb[0].mxu0
        %v610 = vpop.f32.mrb[0].mxu0
        %v611 = vadd.f32 0.0, %v610
        %v612 = vpop.f32.mrb[0].mxu0
        %613 = vmatprep.mubr.bf16.mxu0 0
        %614 = vmatmul.mubr.bf16.gmra.mrb[0].mxu0 %v284
        %v615 = vpop.f32.mrb[0].mxu0
        %v616 = vadd.f32 0.0, %v615
        %v617 = vpop.f32.mrb[0].mxu0
        %v618 = vpop.f32.mrb[0].mxu0
        %v619 = vadd.f32 0.0, %v618
        %v620 = vpop.f32.mrb[0].mxu0
        %621 = vmatprep.mubr.bf16.mxu0 0
        %622 = vmatmul.mubr.bf16.gmra.mrb[0].mxu0 %v287
        %v623 = vpop.f32.mrb[0].mxu0
        %v624 = vadd.f32 0.0, %v623
        %v625 = vpop.f32.mrb[0].mxu0
        %v626 = vpop.f32.mrb[0].mxu0
        %v627 = vadd.f32 0.0, %v626
        %v628 = vpop.f32.mrb[0].mxu0
        %629 = vmatprep.mubr.bf16.mxu0 0
        %630 = vmatmul.mubr.bf16.gmra.mrb[0].mxu0 %v290
        %v631 = vpop.f32.mrb[0].mxu0
        %v632 = vadd.f32 0.0, %v631
        %v633 = vpop.f32.mrb[0].mxu0
        %v634 = vpop.f32.mrb[0].mxu0
        %v635 = vadd.f32 0.0, %v634
        %v636 = vpop.f32.mrb[0].mxu0
        %637 = vmatprep.mubr.bf16.mxu0 0
        %638 = vmatmul.mubr.bf16.gmra.mrb[0].mxu0 %v293
        %v639 = vpop.f32.mrb[0].mxu0
        %v640 = vadd.f32 0.0, %v639
        %v641 = vpop.f32.mrb[0].mxu0
        %v642 = vpop.f32.mrb[0].mxu0
        %v643 = vadd.f32 0.0, %v642
        %v644 = vpop.f32.mrb[0].mxu0
        %645 = vmatprep.mubr.bf16.mxu0 0
        %646 = vmatmul.mubr.bf16.gmra.mrb[0].mxu0 %v296
        %v647 = vpop.f32.mrb[0].mxu0
        %v648 = vadd.f32 0.0, %v647
        %v649 = vpop.f32.mrb[0].mxu0
        %v650 = vpop.f32.mrb[0].mxu0
        %v651 = vadd.f32 0.0, %v650
        %v652 = vpop.f32.mrb[0].mxu0
        %653 = vmatprep.mubr.bf16.mxu0 0
        %654 = vmatmul.mubr.bf16.gmra.mrb[0].mxu0 %v299
        %v655 = vpop.f32.mrb[0].mxu0
        %v656 = vadd.f32 0.0, %v655
        %v657 = vpop.f32.mrb[0].mxu0
        %v658 = vpop.f32.mrb[0].mxu0
        %v659 = vadd.f32 0.0, %v658
        %v660 = vpop.f32.mrb[0].mxu0
        %661 = vmatprep.mubr.bf16.mxu0 0
        %662 = vmatmul.mubr.bf16.gmra.mrb[0].mxu0 %v302
        %v663 = vpop.f32.mrb[0].mxu0
        %v664 = vadd.f32 0.0, %v663
        %v665 = vpop.f32.mrb[0].mxu0
        %v666 = vpop.f32.mrb[0].mxu0
        %v667 = vadd.f32 0.0, %v666
        %v668 = vpop.f32.mrb[0].mxu0
        %669 = vmatprep.mubr.bf16.mxu0 0
        %670 = vmatmul.mubr.bf16.gmra.mrb[0].mxu0 %v305
        %v671 = vpop.f32.mrb[0].mxu0
        %v672 = vadd.f32 0.0, %v671
        %v673 = vpop.f32.mrb[0].mxu0
        %v674 = vpop.f32.mrb[0].mxu0
        %v675 = vadd.f32 0.0, %v674
        %v676 = vpop.f32.mrb[0].mxu0
        %677 = vdwg.mxu0
        %s678 = scalar_lea.vmem %s194, 256 [#allocation7]
        %679 = vst [vmem:[%s678] sm:$0xff] %v552
        %680 = vst [vmem:[%s678 + $0x8] sm:$0xff] %v555
        %681 = vst [vmem:[%s678 + $0x10] sm:$0xff] %v560
        %682 = vst [vmem:[%s678 + $0x18] sm:$0xff] %v563
        %683 = vst [vmem:[%s678 + $0x20] sm:$0xff] %v568
        %684 = vst [vmem:[%s678 + $0x28] sm:$0xff] %v571
        %685 = vst [vmem:[%s678 + $0x30] sm:$0xff] %v576
        %686 = vst [vmem:[%s678 + $0x38] sm:$0xff] %v579
        %687 = vst [vmem:[%s678 + $0x40] sm:$0xff] %v584
        %688 = vst [vmem:[%s678 + $0x48] sm:$0xff] %v587
        %689 = vst [vmem:[%s678 + $0x50] sm:$0xff] %v592
        %690 = vst [vmem:[%s678 + $0x58] sm:$0xff] %v595
        %691 = vst [vmem:[%s678 + $0x60] sm:$0xff] %v600
        %692 = vst [vmem:[%s678 + $0x68] sm:$0xff] %v603
        %693 = vst [vmem:[%s678 + $0x70] sm:$0xff] %v608
        %694 = vst [vmem:[%s678 + $0x78] sm:$0xff] %v611
        %695 = vst [vmem:[%s678 + $0x80] sm:$0xff] %v616
        %696 = vst [vmem:[%s678 + $0x88] sm:$0xff] %v619
        %697 = vst [vmem:[%s678 + $0x90] sm:$0xff] %v624
        %698 = vst [vmem:[%s678 + $0x98] sm:$0xff] %v627
        %699 = vst [vmem:[%s678 + $0xa0] sm:$0xff] %v632
        %700 = vst [vmem:[%s678 + $0xa8] sm:$0xff] %v635
        %701 = vst [vmem:[%s678 + $0xb0] sm:$0xff] %v640
        %702 = vst [vmem:[%s678 + $0xb8] sm:$0xff] %v643
        %703 = vst [vmem:[%s678 + $0xc0] sm:$0xff] %v648
        %704 = vst [vmem:[%s678 + $0xc8] sm:$0xff] %v651
        %705 = vst [vmem:[%s678 + $0xd0] sm:$0xff] %v656
        %706 = vst [vmem:[%s678 + $0xd8] sm:$0xff] %v659
        %707 = vst [vmem:[%s678 + $0xe0] sm:$0xff] %v664
        %708 = vst [vmem:[%s678 + $0xe8] sm:$0xff] %v667
        %709 = vst [vmem:[%s678 + $0xf0] sm:$0xff] %v672
        %710 = vst [vmem:[%s678 + $0xf8] sm:$0xff] %v675
        %s711 = scalar_lea.vmem [#allocation5], 32
        %v712 = vld [vmem:[%s711] sm:$0xf]
        %v713 = vld [vmem:[%s711 + $0x4] sm:$0xf]
        %v714 = vld [vmem:[%s711 + $0x8] sm:$0xf]
        %v715 = vld [vmem:[%s711 + $0xc] sm:$0xf]
        %v720 = vunpack.c.l.b16 %v712
        %v721 = vunpack.c.l.b16 %v713
        %v722 = vunpack.c.l.b16 %v714
        %v723 = vunpack.c.l.b16 %v715
        %v724 = vpack.c.b16 %v721, %v720
        %v725 = vpack.c.b16 %v723, %v722
        %728 = vmatprep.subr.bf16.mxu0 0
        %729 = vmatpush1.bf16.msra.mxu0 %v724
        %730 = vmatprep.subr.bf16.mxu0 0
        %731 = vmatpush1.bf16.msra.mxu0 %v725
        %732 = vmatprep.subr.bf16.mxu0 0
        %733 = vmatpush1.bf16.msra.mxu0 0
        %734 = vmatprep.subr.bf16.mxu0 0
        %735 = vmatpush1.bf16.msra.mxu0 0
        %736 = vmatprep.subr.bf16.mxu0 0
        %737 = vmatpush1.bf16.msra.mxu0 0
        %738 = vmatprep.subr.bf16.mxu0 0
        %739 = vmatpush1.bf16.msra.mxu0 0
        %740 = vmatprep.subr.bf16.mxu0 0
        %741 = vmatpush1.bf16.msra.mxu0 0
        %742 = vmatprep.subr.bf16.mxu0 0
        %743 = vmatpush1.bf16.msra.mxu0 0
        %744 = vmatprep.subr.bf16.mxu0 0
        %745 = vmatpush1.bf16.msra.mxu0 0
        %746 = vmatprep.subr.bf16.mxu0 0
        %747 = vmatpush1.bf16.msra.mxu0 0
        %748 = vmatprep.subr.bf16.mxu0 0
        %749 = vmatpush1.bf16.msra.mxu0 0
        %750 = vmatprep.subr.bf16.mxu0 0
        %751 = vmatpush1.bf16.msra.mxu0 0
        %752 = vmatprep.subr.bf16.mxu0 0
        %753 = vmatpush1.bf16.msra.mxu0 0
        %754 = vmatprep.subr.bf16.mxu0 0
        %755 = vmatpush1.bf16.msra.mxu0 0
        %756 = vmatprep.subr.bf16.mxu0 0
        %757 = vmatpush1.bf16.msra.mxu0 0
        %758 = vmatprep.subr.bf16.mxu0 0
        %759 = vmatpush1.bf16.msra.mxu0 0
        %760 = vmatprep.mubr.bf16.mxu0 0
        %761 = vmatmul.mubr.bf16.gmra.mrb[0].mxu0 %v260
        %v762 = vpop.f32.mrb[0].mxu0
        %v763 = vadd.f32 0.0, %v762
        %v764 = vpop.f32.mrb[0].mxu0
        %v765 = vpop.f32.mrb[0].mxu0
        %v766 = vadd.f32 0.0, %v765
        %v767 = vpop.f32.mrb[0].mxu0
        %768 = vmatprep.mubr.bf16.mxu0 0
        %769 = vmatmul.mubr.bf16.gmra.mrb[0].mxu0 %v263
        %v770 = vpop.f32.mrb[0].mxu0
        %v771 = vadd.f32 0.0, %v770
        %v772 = vpop.f32.mrb[0].mxu0
        %v773 = vpop.f32.mrb[0].mxu0
        %v774 = vadd.f32 0.0, %v773
        %v775 = vpop.f32.mrb[0].mxu0
        %776 = vmatprep.mubr.bf16.mxu0 0
        %777 = vmatmul.mubr.bf16.gmra.mrb[0].mxu0 %v266
        %v778 = vpop.f32.mrb[0].mxu0
        %v779 = vadd.f32 0.0, %v778
        %v780 = vpop.f32.mrb[0].mxu0
        %v781 = vpop.f32.mrb[0].mxu0
        %v782 = vadd.f32 0.0, %v781
        %v783 = vpop.f32.mrb[0].mxu0
        %784 = vmatprep.mubr.bf16.mxu0 0
        %785 = vmatmul.mubr.bf16.gmra.mrb[0].mxu0 %v269
        %v786 = vpop.f32.mrb[0].mxu0
        %v787 = vadd.f32 0.0, %v786
        %v788 = vpop.f32.mrb[0].mxu0
        %v789 = vpop.f32.mrb[0].mxu0
        %v790 = vadd.f32 0.0, %v789
        %v791 = vpop.f32.mrb[0].mxu0
        %792 = vmatprep.mubr.bf16.mxu0 0
        %793 = vmatmul.mubr.bf16.gmra.mrb[0].mxu0 %v272
        %v794 = vpop.f32.mrb[0].mxu0
        %v795 = vadd.f32 0.0, %v794
        %v796 = vpop.f32.mrb[0].mxu0
        %v797 = vpop.f32.mrb[0].mxu0
        %v798 = vadd.f32 0.0, %v797
        %v799 = vpop.f32.mrb[0].mxu0
        %800 = vmatprep.mubr.bf16.mxu0 0
        %801 = vmatmul.mubr.bf16.gmra.mrb[0].mxu0 %v275
        %v802 = vpop.f32.mrb[0].mxu0
        %v803 = vadd.f32 0.0, %v802
        %v804 = vpop.f32.mrb[0].mxu0
        %v805 = vpop.f32.mrb[0].mxu0
        %v806 = vadd.f32 0.0, %v805
        %v807 = vpop.f32.mrb[0].mxu0
        %808 = vmatprep.mubr.bf16.mxu0 0
        %809 = vmatmul.mubr.bf16.gmra.mrb[0].mxu0 %v278
        %v810 = vpop.f32.mrb[0].mxu0
        %v811 = vadd.f32 0.0, %v810
        %v812 = vpop.f32.mrb[0].mxu0
        %v813 = vpop.f32.mrb[0].mxu0
        %v814 = vadd.f32 0.0, %v813
        %v815 = vpop.f32.mrb[0].mxu0
        %816 = vmatprep.mubr.bf16.mxu0 0
        %817 = vmatmul.mubr.bf16.gmra.mrb[0].mxu0 %v281
        %v818 = vpop.f32.mrb[0].mxu0
        %v819 = vadd.f32 0.0, %v818
        %v820 = vpop.f32.mrb[0].mxu0
        %v821 = vpop.f32.mrb[0].mxu0
        %v822 = vadd.f32 0.0, %v821
        %v823 = vpop.f32.mrb[0].mxu0
        %824 = vmatprep.mubr.bf16.mxu0 0
        %825 = vmatmul.mubr.bf16.gmra.mrb[0].mxu0 %v284
        %v826 = vpop.f32.mrb[0].mxu0
        %v827 = vadd.f32 0.0, %v826
        %v828 = vpop.f32.mrb[0].mxu0
        %v829 = vpop.f32.mrb[0].mxu0
        %v830 = vadd.f32 0.0, %v829
        %v831 = vpop.f32.mrb[0].mxu0
        %832 = vmatprep.mubr.bf16.mxu0 0
        %833 = vmatmul.mubr.bf16.gmra.mrb[0].mxu0 %v287
        %v834 = vpop.f32.mrb[0].mxu0
        %v835 = vadd.f32 0.0, %v834
        %v836 = vpop.f32.mrb[0].mxu0
        %v837 = vpop.f32.mrb[0].mxu0
        %v838 = vadd.f32 0.0, %v837
        %v839 = vpop.f32.mrb[0].mxu0
        %840 = vmatprep.mubr.bf16.mxu0 0
        %841 = vmatmul.mubr.bf16.gmra.mrb[0].mxu0 %v290
        %v842 = vpop.f32.mrb[0].mxu0
        %v843 = vadd.f32 0.0, %v842
        %v844 = vpop.f32.mrb[0].mxu0
        %v845 = vpop.f32.mrb[0].mxu0
        %v846 = vadd.f32 0.0, %v845
        %v847 = vpop.f32.mrb[0].mxu0
        %848 = vmatprep.mubr.bf16.mxu0 0
        %849 = vmatmul.mubr.bf16.gmra.mrb[0].mxu0 %v293
        %v850 = vpop.f32.mrb[0].mxu0
        %v851 = vadd.f32 0.0, %v850
        %v852 = vpop.f32.mrb[0].mxu0
        %v853 = vpop.f32.mrb[0].mxu0
        %v854 = vadd.f32 0.0, %v853
        %v855 = vpop.f32.mrb[0].mxu0
        %856 = vmatprep.mubr.bf16.mxu0 0
        %857 = vmatmul.mubr.bf16.gmra.mrb[0].mxu0 %v296
        %v858 = vpop.f32.mrb[0].mxu0
        %v859 = vadd.f32 0.0, %v858
        %v860 = vpop.f32.mrb[0].mxu0
        %v861 = vpop.f32.mrb[0].mxu0
        %v862 = vadd.f32 0.0, %v861
        %v863 = vpop.f32.mrb[0].mxu0
        %864 = vmatprep.mubr.bf16.mxu0 0
        %865 = vmatmul.mubr.bf16.gmra.mrb[0].mxu0 %v299
        %v866 = vpop.f32.mrb[0].mxu0
        %v867 = vadd.f32 0.0, %v866
        %v868 = vpop.f32.mrb[0].mxu0
        %v869 = vpop.f32.mrb[0].mxu0
        %v870 = vadd.f32 0.0, %v869
        %v871 = vpop.f32.mrb[0].mxu0
        %872 = vmatprep.mubr.bf16.mxu0 0
        %873 = vmatmul.mubr.bf16.gmra.mrb[0].mxu0 %v302
        %v874 = vpop.f32.mrb[0].mxu0
        %v875 = vadd.f32 0.0, %v874
        %v876 = vpop.f32.mrb[0].mxu0
        %v877 = vpop.f32.mrb[0].mxu0
        %v878 = vadd.f32 0.0, %v877
        %v879 = vpop.f32.mrb[0].mxu0
        %880 = vmatprep.mubr.bf16.mxu0 0
        %881 = vmatmul.mubr.bf16.gmra.mrb[0].mxu0 %v305
        %v882 = vpop.f32.mrb[0].mxu0
        %v883 = vadd.f32 0.0, %v882
        %v884 = vpop.f32.mrb[0].mxu0
        %v885 = vpop.f32.mrb[0].mxu0
        %v886 = vadd.f32 0.0, %v885
        %v887 = vpop.f32.mrb[0].mxu0
        %888 = vdwg.mxu0
        %s889 = scalar_lea.vmem %s194, 512 [#allocation7]
        %890 = vst [vmem:[%s889] sm:$0xff] %v763
        %891 = vst [vmem:[%s889 + $0x8] sm:$0xff] %v766
        %892 = vst [vmem:[%s889 + $0x10] sm:$0xff] %v771
        %893 = vst [vmem:[%s889 + $0x18] sm:$0xff] %v774
        %894 = vst [vmem:[%s889 + $0x20] sm:$0xff] %v779
        %895 = vst [vmem:[%s889 + $0x28] sm:$0xff] %v782
        %896 = vst [vmem:[%s889 + $0x30] sm:$0xff] %v787
        %897 = vst [vmem:[%s889 + $0x38] sm:$0xff] %v790
        %898 = vst [vmem:[%s889 + $0x40] sm:$0xff] %v795
        %899 = vst [vmem:[%s889 + $0x48] sm:$0xff] %v798
        %900 = vst [vmem:[%s889 + $0x50] sm:$0xff] %v803
        %901 = vst [vmem:[%s889 + $0x58] sm:$0xff] %v806
        %902 = vst [vmem:[%s889 + $0x60] sm:$0xff] %v811
        %903 = vst [vmem:[%s889 + $0x68] sm:$0xff] %v814
        %904 = vst [vmem:[%s889 + $0x70] sm:$0xff] %v819
        %905 = vst [vmem:[%s889 + $0x78] sm:$0xff] %v822
        %906 = vst [vmem:[%s889 + $0x80] sm:$0xff] %v827
        %907 = vst [vmem:[%s889 + $0x88] sm:$0xff] %v830
        %908 = vst [vmem:[%s889 + $0x90] sm:$0xff] %v835
        %909 = vst [vmem:[%s889 + $0x98] sm:$0xff] %v838
        %910 = vst [vmem:[%s889 + $0xa0] sm:$0xff] %v843
        %911 = vst [vmem:[%s889 + $0xa8] sm:$0xff] %v846
        %912 = vst [vmem:[%s889 + $0xb0] sm:$0xff] %v851
        %913 = vst [vmem:[%s889 + $0xb8] sm:$0xff] %v854
        %914 = vst [vmem:[%s889 + $0xc0] sm:$0xff] %v859
        %915 = vst [vmem:[%s889 + $0xc8] sm:$0xff] %v862
        %916 = vst [vmem:[%s889 + $0xd0] sm:$0xff] %v867
        %917 = vst [vmem:[%s889 + $0xd8] sm:$0xff] %v870
        %918 = vst [vmem:[%s889 + $0xe0] sm:$0xff] %v875
        %919 = vst [vmem:[%s889 + $0xe8] sm:$0xff] %v878
        %920 = vst [vmem:[%s889 + $0xf0] sm:$0xff] %v883
        %921 = vst [vmem:[%s889 + $0xf8] sm:$0xff] %v886
        %s922 = scalar_lea.vmem [#allocation5], 48
        %v923 = vld [vmem:[%s922] sm:$0xf]
        %v924 = vld [vmem:[%s922 + $0x4] sm:$0xf]
        %v925 = vld [vmem:[%s922 + $0x8] sm:$0xf]
        %v926 = vld [vmem:[%s922 + $0xc] sm:$0xf]
        %v931 = vunpack.c.l.b16 %v923
        %v932 = vunpack.c.l.b16 %v924
        %v933 = vunpack.c.l.b16 %v925
        %v934 = vunpack.c.l.b16 %v926
        %v935 = vpack.c.b16 %v932, %v931
        %v936 = vpack.c.b16 %v934, %v933
        %939 = vmatprep.subr.bf16.mxu0 0
        %940 = vmatpush1.bf16.msra.mxu0 %v935
        %941 = vmatprep.subr.bf16.mxu0 0
        %942 = vmatpush1.bf16.msra.mxu0 %v936
        %943 = vmatprep.subr.bf16.mxu0 0
        %944 = vmatpush1.bf16.msra.mxu0 0
        %945 = vmatprep.subr.bf16.mxu0 0
        %946 = vmatpush1.bf16.msra.mxu0 0
        %947 = vmatprep.subr.bf16.mxu0 0
        %948 = vmatpush1.bf16.msra.mxu0 0
        %949 = vmatprep.subr.bf16.mxu0 0
        %950 = vmatpush1.bf16.msra.mxu0 0
        %951 = vmatprep.subr.bf16.mxu0 0
        %952 = vmatpush1.bf16.msra.mxu0 0
        %953 = vmatprep.subr.bf16.mxu0 0
        %954 = vmatpush1.bf16.msra.mxu0 0
        %955 = vmatprep.subr.bf16.mxu0 0
        %956 = vmatpush1.bf16.msra.mxu0 0
        %957 = vmatprep.subr.bf16.mxu0 0
        %958 = vmatpush1.bf16.msra.mxu0 0
        %959 = vmatprep.subr.bf16.mxu0 0
        %960 = vmatpush1.bf16.msra.mxu0 0
        %961 = vmatprep.subr.bf16.mxu0 0
        %962 = vmatpush1.bf16.msra.mxu0 0
        %963 = vmatprep.subr.bf16.mxu0 0
        %964 = vmatpush1.bf16.msra.mxu0 0
        %965 = vmatprep.subr.bf16.mxu0 0
        %966 = vmatpush1.bf16.msra.mxu0 0
        %967 = vmatprep.subr.bf16.mxu0 0
        %968 = vmatpush1.bf16.msra.mxu0 0
        %969 = vmatprep.subr.bf16.mxu0 0
        %970 = vmatpush1.bf16.msra.mxu0 0
        %971 = vmatprep.mubr.bf16.mxu0 0
        %972 = vmatmul.mubr.bf16.gmra.mrb[0].mxu0 %v260
        %v973 = vpop.f32.mrb[0].mxu0
        %v974 = vadd.f32 0.0, %v973
        %v975 = vpop.f32.mrb[0].mxu0
        %v976 = vpop.f32.mrb[0].mxu0
        %v977 = vadd.f32 0.0, %v976
        %v978 = vpop.f32.mrb[0].mxu0
        %979 = vmatprep.mubr.bf16.mxu0 0
        %980 = vmatmul.mubr.bf16.gmra.mrb[0].mxu0 %v263
        %v981 = vpop.f32.mrb[0].mxu0
        %v982 = vadd.f32 0.0, %v981
        %v983 = vpop.f32.mrb[0].mxu0
        %v984 = vpop.f32.mrb[0].mxu0
        %v985 = vadd.f32 0.0, %v984
        %v986 = vpop.f32.mrb[0].mxu0
        %987 = vmatprep.mubr.bf16.mxu0 0
        %988 = vmatmul.mubr.bf16.gmra.mrb[0].mxu0 %v266
        %v989 = vpop.f32.mrb[0].mxu0
        %v990 = vadd.f32 0.0, %v989
        %v991 = vpop.f32.mrb[0].mxu0
        %v992 = vpop.f32.mrb[0].mxu0
        %v993 = vadd.f32 0.0, %v992
        %v994 = vpop.f32.mrb[0].mxu0
        %995 = vmatprep.mubr.bf16.mxu0 0
        %996 = vmatmul.mubr.bf16.gmra.mrb[0].mxu0 %v269
        %v997 = vpop.f32.mrb[0].mxu0
        %v998 = vadd.f32 0.0, %v997
        %v999 = vpop.f32.mrb[0].mxu0
        %v1000 = vpop.f32.mrb[0].mxu0
        %v1001 = vadd.f32 0.0, %v1000
        %v1002 = vpop.f32.mrb[0].mxu0
        %1003 = vmatprep.mubr.bf16.mxu0 0
        %1004 = vmatmul.mubr.bf16.gmra.mrb[0].mxu0 %v272
        %v1005 = vpop.f32.mrb[0].mxu0
        %v1006 = vadd.f32 0.0, %v1005
        %v1007 = vpop.f32.mrb[0].mxu0
        %v1008 = vpop.f32.mrb[0].mxu0
        %v1009 = vadd.f32 0.0, %v1008
        %v1010 = vpop.f32.mrb[0].mxu0
        %1011 = vmatprep.mubr.bf16.mxu0 0
        %1012 = vmatmul.mubr.bf16.gmra.mrb[0].mxu0 %v275
        %v1013 = vpop.f32.mrb[0].mxu0
        %v1014 = vadd.f32 0.0, %v1013
        %v1015 = vpop.f32.mrb[0].mxu0
        %v1016 = vpop.f32.mrb[0].mxu0
        %v1017 = vadd.f32 0.0, %v1016
        %v1018 = vpop.f32.mrb[0].mxu0
        %1019 = vmatprep.mubr.bf16.mxu0 0
        %1020 = vmatmul.mubr.bf16.gmra.mrb[0].mxu0 %v278
        %v1021 = vpop.f32.mrb[0].mxu0
        %v1022 = vadd.f32 0.0, %v1021
        %v1023 = vpop.f32.mrb[0].mxu0
        %v1024 = vpop.f32.mrb[0].mxu0
        %v1025 = vadd.f32 0.0, %v1024
        %v1026 = vpop.f32.mrb[0].mxu0
        %1027 = vmatprep.mubr.bf16.mxu0 0
        %1028 = vmatmul.mubr.bf16.gmra.mrb[0].mxu0 %v281
        %v1029 = vpop.f32.mrb[0].mxu0
        %v1030 = vadd.f32 0.0, %v1029
        %v1031 = vpop.f32.mrb[0].mxu0
        %v1032 = vpop.f32.mrb[0].mxu0
        %v1033 = vadd.f32 0.0, %v1032
        %v1034 = vpop.f32.mrb[0].mxu0
        %1035 = vmatprep.mubr.bf16.mxu0 0
        %1036 = vmatmul.mubr.bf16.gmra.mrb[0].mxu0 %v284
        %v1037 = vpop.f32.mrb[0].mxu0
        %v1038 = vadd.f32 0.0, %v1037
        %v1039 = vpop.f32.mrb[0].mxu0
        %v1040 = vpop.f32.mrb[0].mxu0
        %v1041 = vadd.f32 0.0, %v1040
        %v1042 = vpop.f32.mrb[0].mxu0
        %1043 = vmatprep.mubr.bf16.mxu0 0
        %1044 = vmatmul.mubr.bf16.gmra.mrb[0].mxu0 %v287
        %v1045 = vpop.f32.mrb[0].mxu0
        %v1046 = vadd.f32 0.0, %v1045
        %v1047 = vpop.f32.mrb[0].mxu0
        %v1048 = vpop.f32.mrb[0].mxu0
        %v1049 = vadd.f32 0.0, %v1048
        %v1050 = vpop.f32.mrb[0].mxu0
        %1051 = vmatprep.mubr.bf16.mxu0 0
        %1052 = vmatmul.mubr.bf16.gmra.mrb[0].mxu0 %v290
        %v1053 = vpop.f32.mrb[0].mxu0
        %v1054 = vadd.f32 0.0, %v1053
        %v1055 = vpop.f32.mrb[0].mxu0
        %v1056 = vpop.f32.mrb[0].mxu0
        %v1057 = vadd.f32 0.0, %v1056
        %v1058 = vpop.f32.mrb[0].mxu0
        %1059 = vmatprep.mubr.bf16.mxu0 0
        %1060 = vmatmul.mubr.bf16.gmra.mrb[0].mxu0 %v293
        %v1061 = vpop.f32.mrb[0].mxu0
        %v1062 = vadd.f32 0.0, %v1061
        %v1063 = vpop.f32.mrb[0].mxu0
        %v1064 = vpop.f32.mrb[0].mxu0
        %v1065 = vadd.f32 0.0, %v1064
        %v1066 = vpop.f32.mrb[0].mxu0
        %1067 = vmatprep.mubr.bf16.mxu0 0
        %1068 = vmatmul.mubr.bf16.gmra.mrb[0].mxu0 %v296
        %v1069 = vpop.f32.mrb[0].mxu0
        %v1070 = vadd.f32 0.0, %v1069
        %v1071 = vpop.f32.mrb[0].mxu0
        %v1072 = vpop.f32.mrb[0].mxu0
        %v1073 = vadd.f32 0.0, %v1072
        %v1074 = vpop.f32.mrb[0].mxu0
        %1075 = vmatprep.mubr.bf16.mxu0 0
        %1076 = vmatmul.mubr.bf16.gmra.mrb[0].mxu0 %v299
        %v1077 = vpop.f32.mrb[0].mxu0
        %v1078 = vadd.f32 0.0, %v1077
        %v1079 = vpop.f32.mrb[0].mxu0
        %v1080 = vpop.f32.mrb[0].mxu0
        %v1081 = vadd.f32 0.0, %v1080
        %v1082 = vpop.f32.mrb[0].mxu0
        %1083 = vmatprep.mubr.bf16.mxu0 0
        %1084 = vmatmul.mubr.bf16.gmra.mrb[0].mxu0 %v302
        %v1085 = vpop.f32.mrb[0].mxu0
        %v1086 = vadd.f32 0.0, %v1085
        %v1087 = vpop.f32.mrb[0].mxu0
        %v1088 = vpop.f32.mrb[0].mxu0
        %v1089 = vadd.f32 0.0, %v1088
        %v1090 = vpop.f32.mrb[0].mxu0
        %1091 = vmatprep.mubr.bf16.mxu0 0
        %1092 = vmatmul.mubr.bf16.gmra.mrb[0].mxu0 %v305
        %v1093 = vpop.f32.mrb[0].mxu0
        %v1094 = vadd.f32 0.0, %v1093
        %v1095 = vpop.f32.mrb[0].mxu0
        %v1096 = vpop.f32.mrb[0].mxu0
        %v1097 = vadd.f32 0.0, %v1096
        %v1098 = vpop.f32.mrb[0].mxu0
        %1099 = vdwg.mxu0
        %s1100 = scalar_lea.vmem %s194, 768 [#allocation7]
        %1101 = vst [vmem:[%s1100] sm:$0xff] %v974
        %1102 = vst [vmem:[%s1100 + $0x8] sm:$0xff] %v977
        %1103 = vst [vmem:[%s1100 + $0x10] sm:$0xff] %v982
        %1104 = vst [vmem:[%s1100 + $0x18] sm:$0xff] %v985
        %1105 = vst [vmem:[%s1100 + $0x20] sm:$0xff] %v990
        %1106 = vst [vmem:[%s1100 + $0x28] sm:$0xff] %v993
        %1107 = vst [vmem:[%s1100 + $0x30] sm:$0xff] %v998
        %1108 = vst [vmem:[%s1100 + $0x38] sm:$0xff] %v1001
        %1109 = vst [vmem:[%s1100 + $0x40] sm:$0xff] %v1006
        %1110 = vst [vmem:[%s1100 + $0x48] sm:$0xff] %v1009
        %1111 = vst [vmem:[%s1100 + $0x50] sm:$0xff] %v1014
        %1112 = vst [vmem:[%s1100 + $0x58] sm:$0xff] %v1017
        %1113 = vst [vmem:[%s1100 + $0x60] sm:$0xff] %v1022
        %1114 = vst [vmem:[%s1100 + $0x68] sm:$0xff] %v1025
        %1115 = vst [vmem:[%s1100 + $0x70] sm:$0xff] %v1030
        %1116 = vst [vmem:[%s1100 + $0x78] sm:$0xff] %v1033
        %1117 = vst [vmem:[%s1100 + $0x80] sm:$0xff] %v1038
        %1118 = vst [vmem:[%s1100 + $0x88] sm:$0xff] %v1041
        %1119 = vst [vmem:[%s1100 + $0x90] sm:$0xff] %v1046
        %1120 = vst [vmem:[%s1100 + $0x98] sm:$0xff] %v1049
        %1121 = vst [vmem:[%s1100 + $0xa0] sm:$0xff] %v1054
        %1122 = vst [vmem:[%s1100 + $0xa8] sm:$0xff] %v1057
        %1123 = vst [vmem:[%s1100 + $0xb0] sm:$0xff] %v1062
        %1124 = vst [vmem:[%s1100 + $0xb8] sm:$0xff] %v1065
        %1125 = vst [vmem:[%s1100 + $0xc0] sm:$0xff] %v1070
        %1126 = vst [vmem:[%s1100 + $0xc8] sm:$0xff] %v1073
        %1127 = vst [vmem:[%s1100 + $0xd0] sm:$0xff] %v1078
        %1128 = vst [vmem:[%s1100 + $0xd8] sm:$0xff] %v1081
        %1129 = vst [vmem:[%s1100 + $0xe0] sm:$0xff] %v1086
        %1130 = vst [vmem:[%s1100 + $0xe8] sm:$0xff] %v1089
        %1131 = vst [vmem:[%s1100 + $0xf0] sm:$0xff] %v1094
        %1132 = vst [vmem:[%s1100 + $0xf8] sm:$0xff] %v1097
        %s1133 = sand.u32 %s91, 1
        %s1134 = scalar_lea.sflag [#allocation4], %s1133
        %s1135 = sand.u32 %s91, 1
        %s1136 = smul.addr %s1135, 1024
        %s1137 = scalar_lea.vmem [#allocation7], %s1136
        // Predicated region
        $region37: #{tpu_custom_call.1} parent=27 // pred_check
          %p1138 = pneg %p101
        $region38: #{tpu_custom_call.1} parent=27 // pred_check_branch
          %1140 = sbr.rel (%p1138) target = $region40
        $region39: #{tpu_custom_call.1} parent=27 // pred_region
          %s1141 = smul.u32 32, %s25
          %s1143 = ssub.s32 16384, 16384
          %1144 = vsyncadd %s1134, %s1143
          %s1145 = smul.addr %s24, 128
          %s1146 = sadd.s32 %s1141, %s1145
          %s1147 = smul.addr %s1146, 128
          %s1148 = scalar_lea.hbm %s2, %s1147
          %s1149 = sshll.u32 %s1137, 4
          %s1150 = int_to_ptr.vmem [resolvable:$true] %s1149
          %1155 = dma.vmem_to_hbm [thread:$0]  %s1150, 16384, %s1148, %s1134, 128, 128, 8
        $region40: #{tpu_custom_call.1} parent=27 // pred_fallthru
          _
      $region28: #{tpu_custom_call.1} parent=5 // pred_fallthru
        _
      %p1156 = scmp.le.s32.totalorder 2, %s15
      // Predicated region
      $region41: #{tpu_custom_call.1} parent=5 // pred_check
        %p1157 = pneg %p1156
      $region42: #{tpu_custom_call.1} parent=5 // pred_check_branch
        %1159 = sbr.rel (%p1157) target = $region44
      $region43: #{tpu_custom_call.1} parent=5 // pred_region
        %s1160 = ssub.s32 %s15, 2
        // Predicated region
        $region45: #{tpu_custom_call.1} parent=43 // pred_check
          %p1161 = pneg %p107
        $region46: #{tpu_custom_call.1} parent=43 // pred_check_branch
          %1163 = sbr.rel (%p1161) target = $region48
        $region47: #{tpu_custom_call.1} parent=43 // pred_region
          %s1164 = sand.u32 %s92, 1
          %s1165 = scalar_lea.sflag [#allocation4], %s1164
          %s1166 = sand.u32 %s92, 1
          %s1167 = smul.addr %s1166, 1024
          %s1168 = scalar_lea.vmem [#allocation7], %s1167
          %1169 = dma.done %s1165, 16384
        $region48: #{tpu_custom_call.1} parent=43 // pred_fallthru
          _
      $region44: #{tpu_custom_call.1} parent=5 // pred_fallthru
        _
    $region6: #{tpu_custom_call.1} parent=1 // loop_footer
      %s19 = sadd.s32 1, %s15
    $region7: #{tpu_custom_call.1} parent=1 // loop_footer_branch
      %14 = sbr.rel target = $region3
    $region8: #{tpu_custom_call.1} parent=1 // loop_exit
      _
    %1170 = vsyncpa [#allocation3], 1
    %s1171 = scalar_lea.sflag [#allocation3], 1
    %1172 = vsyncpa %s1171, 1
    %1173 = vsyncpa [#allocation6], 1
    %1174 = vsyncpa [#allocation4], 1
    %s1175 = scalar_lea.sflag [#allocation4], 1
    %1176 = vsyncpa %s1175, 1

</llo_original>
